<compile_context>
chip_gen: v7x
topology: tpu7x:2x2x1
jax: 0.10.0
libtpu: 0.0.40
codegen_flags: <defaults>
</compile_context>

<pallas_src>
import jax
import jax.numpy as jnp
from jax import lax
from jax.experimental import pallas as pl
from jax.experimental.pallas import tpu as pltpu

NEG_INF = -1e30                      # finite "-inf": online-softmax math stays NaN-free
_PREC = lax.Precision.HIGHEST        # keep f32 accuracy end-to-end (perf knob: DEFAULT)


# ----------------------------------------------------------------------------
# Stage 1: node projection  z = h @ W^T  (+ per-node attention scalars)
# ----------------------------------------------------------------------------
def project_kernel(h_ref, w_ref, a_src_ref, a_dst_ref, z_ref, s_src_ref, s_dst_ref):
    # Lane-dense MXU matmul: (tn, in_dim) @ (in_dim, dp) with dp a multiple of 128.
    z = jnp.dot(h_ref[...], w_ref[...],
                preferred_element_type=jnp.float32, precision=_PREC)
    z_ref[...] = z
    # Attention projections as broadcast-multiply + row reduction (VPU/XLU),
    # instead of two 1-wide MXU matmuls.
    s_src_ref[...] = jnp.sum(z * a_src_ref[...], axis=-1, keepdims=True)  # (tn, 1)
    s_dst_ref[...] = jnp.sum(z * a_dst_ref[...], axis=-1, keepdims=True)  # (tn, 1)


def gat_project(h, w_pad, a_src_row, a_dst_row, *, node_tile):
    n, in_dim = h.shape
    dp = w_pad.shape[1]
    tn = min(node_tile, n)
    assert n % tn == 0, "N must be divisible by node_tile"
    return pl.pallas_call(
        project_kernel,
        out_shape=(
            jax.ShapeDtypeStruct((n, dp), jnp.float32),  # z_pad
            jax.ShapeDtypeStruct((n, 1), jnp.float32),   # s_src (column)
            jax.ShapeDtypeStruct((n, 1), jnp.float32),   # s_dst (column)
        ),
        grid_spec=pltpu.PrefetchScalarGridSpec(
            num_scalar_prefetch=0,
            grid=(n // tn,),
            in_specs=[
                pl.BlockSpec((tn, in_dim), lambda i: (i, 0)),
                pl.BlockSpec((in_dim, dp), lambda i: (0, 0)),
                pl.BlockSpec((1, dp), lambda i: (0, 0)),
                pl.BlockSpec((1, dp), lambda i: (0, 0)),
            ],
            out_specs=[
                pl.BlockSpec((tn, dp), lambda i: (i, 0)),
                pl.BlockSpec((tn, 1), lambda i: (i, 0)),
                pl.BlockSpec((tn, 1), lambda i: (i, 0)),
            ],
        ),
        compiler_params=pltpu.CompilerParams(dimension_semantics=("parallel",)),
    )(h, w_pad, a_src_row, a_dst_row)


# ----------------------------------------------------------------------------
# Stage 2: tiled masked-softmax aggregation with online softmax
#   grid = (dst_tiles, src_tiles); scratch carries (m, l, acc) across src tiles.
# ----------------------------------------------------------------------------
def attn_kernel(s_dst_ref, s_src_ref, adj_ref, z_ref, out_ref, m_sc, l_sc, acc_sc):
    sj = pl.program_id(1)

    @pl.when(sj == 0)
    def _():
        m_sc[...] = jnp.full_like(m_sc, NEG_INF)
        l_sc[...] = jnp.zeros_like(l_sc)
        acc_sc[...] = jnp.zeros_like(acc_sc)

    # e[d, s] = leaky_relu(s_dst[d] + s_src[s]); masked where there is no edge.
    mask = adj_ref[...] > 0                      # int8 adjacency -> bool mask
    e = s_dst_ref[...] + s_src_ref[...]          # (td, 1) + (1, ts) -> (td, ts)
    e = jnp.where(e > 0, e, 0.01 * e)            # LeakyReLU, slope 0.01
    e = jnp.where(mask, e, NEG_INF)

    m_prev = m_sc[...]
    m_new = jnp.maximum(m_prev, jnp.max(e, axis=-1, keepdims=True))
    corr = jnp.exp(m_prev - m_new)
    # Explicit mask keeps rows correct even when no edge has been seen yet for a
    # dst row (m still at NEG_INF); the select is VPU-cheap vs. the matmul below.
    p = jnp.where(mask, jnp.exp(e - m_new), 0.0)
    l_sc[...] = corr * l_sc[...] + jnp.sum(p, axis=-1, keepdims=True)
    acc_sc[...] = corr * acc_sc[...] + jnp.dot(
        p, z_ref[...], preferred_element_type=jnp.float32, precision=_PREC
    )
    m_sc[...] = m_new

    @pl.when(sj == pl.num_programs(1) - 1)
    def _():
        denom = l_sc[...]
        denom = jnp.where(denom == 0.0, 1.0, denom)   # safety for degenerate rows
        out_ref[...] = acc_sc[...] * (1.0 / denom)


def gat_aggregate(s_dst, s_src_row, adj_i8, z_pad, *, dst_tile, src_tile):
    n = s_dst.shape[0]
    dp = z_pad.shape[1]
    td = min(dst_tile, n)
    ts = min(src_tile, n)
    assert n % td == 0 and n % ts == 0, "N must be divisible by dst/src tiles"
    return pl.pallas_call(
        attn_kernel,
        out_shape=jax.ShapeDtypeStruct((n, dp), jnp.float32),
        grid_spec=pltpu.PrefetchScalarGridSpec(
            num_scalar_prefetch=0,
            grid=(n // td, n // ts),
            in_specs=[
                pl.BlockSpec((td, 1), lambda di, sj: (di, 0)),    # s_dst column
                pl.BlockSpec((1, ts), lambda di, sj: (0, sj)),    # s_src row
                pl.BlockSpec((td, ts), lambda di, sj: (di, sj)),  # adj tile (int8)
                pl.BlockSpec((ts, dp), lambda di, sj: (sj, 0)),   # z src tile
            ],
            out_specs=pl.BlockSpec((td, dp), lambda di, sj: (di, 0)),
            scratch_shapes=[
                pltpu.VMEM((td, 1), jnp.float32),   # running max m
                pltpu.VMEM((td, 1), jnp.float32),   # running denom l
                pltpu.VMEM((td, dp), jnp.float32),  # running accumulator
            ],
        ),
        compiler_params=pltpu.CompilerParams(
            dimension_semantics=("parallel", "arbitrary"),
            vmem_limit_bytes=32 * 1024 * 1024,
        ),
    )(s_dst, s_src_row, adj_i8, z_pad)


# ----------------------------------------------------------------------------
# Full forward wrapper (matches GATLayer.forward semantics)
# ----------------------------------------------------------------------------
def gat_forward(h, w, a, adj_i8, *, node_tile=128, dst_tile=128, src_tile=128):
    """h: (N, in_dim) f32; w: (out_dim, in_dim) fc weight; a: (1, 2*out_dim)
    attn_fc weight; adj_i8: (N, N) int8 with adj[dst, src] = 1 iff edge src->dst."""
    n, in_dim = h.shape
    out_dim = w.shape[0]
    dp = ((out_dim + 127) // 128) * 128  # lane-dense padded feature width

    w_pad = jnp.zeros((in_dim, dp), jnp.float32).at[:, :out_dim].set(w.T)
    a_src_row = jnp.zeros((1, dp), jnp.float32).at[0, :out_dim].set(a[0, :out_dim])
    a_dst_row = jnp.zeros((1, dp), jnp.float32).at[0, :out_dim].set(a[0, out_dim:])

    z_pad, s_src, s_dst = gat_project(h, w_pad, a_src_row, a_dst_row,
                                      node_tile=node_tile)
    out_pad = gat_aggregate(s_dst, s_src.T, adj_i8, z_pad,
                            dst_tile=dst_tile, src_tile=src_tile)
    return out_pad[:, :out_dim]


# ----------------------------------------------------------------------------
# Pure-JAX reference (full-precision, matches PyTorch math)
# ----------------------------------------------------------------------------
def _reference(h, w, a, adj_bool, out_dim):
    z = jnp.dot(h, w.T, precision=_PREC)
    s_src = jnp.dot(z, a[0, :out_dim], precision=_PREC)
    s_dst = jnp.dot(z, a[0, out_dim:], precision=_PREC)
    e = s_dst[:, None] + s_src[None, :]
    e = jnp.where(e > 0, e, 0.01 * e)
    e = jnp.where(adj_bool, e, -jnp.inf)
    m = jnp.max(e, axis=1, keepdims=True)
    p = jnp.where(adj_bool, jnp.exp(e - m), 0.0)
    alpha = p / jnp.sum(p, axis=1, keepdims=True)
    return jnp.dot(alpha, z, precision=_PREC)


if __name__ == "__main__":
    key = jax.random.PRNGKey(0)
    N, in_dim, out_dim = 256, 16, 32   # N chosen so the 2-D grid has >1 tile/axis

    k_h, k_w, k_a, k_g = jax.random.split(key, 4)

    # Node features
    h = jax.random.normal(k_h, (N, in_dim), dtype=jnp.float32)

    # fc.weight ~ xavier_normal_(gain=sqrt(2)), shape (out_dim, in_dim)
    gain = jnp.sqrt(2.0)
    std_fc = gain * jnp.sqrt(2.0 / (in_dim + out_dim))
    w = jax.random.normal(k_w, (out_dim, in_dim), dtype=jnp.float32) * std_fc

    # attn_fc.weight ~ xavier_normal_(gain=sqrt(2)), shape (1, 2*out_dim)
    std_a = gain * jnp.sqrt(2.0 / (2 * out_dim + 1))
    a = jax.random.normal(k_a, (1, 2 * out_dim), dtype=jnp.float32) * std_a

    # Random symmetric graph (p = 0.4), no self loops, plus a ring so every node
    # has at least one incoming edge (mirrors random_connected_graph's guarantee).
    u = jax.random.uniform(k_g, (N, N))
    upper = jnp.triu(u < 0.4, k=1)
    adj_bool = upper | upper.T
    ring = jnp.eye(N, k=1, dtype=bool) | jnp.eye(N, k=-1, dtype=bool)
    ring = ring.at[0, N - 1].set(True).at[N - 1, 0].set(True)
    adj_bool = adj_bool | ring
    adj_i8 = adj_bool.astype(jnp.int8)   # 4x less HBM traffic than f32

    out = gat_forward(h, w, a, adj_i8)
    jax.block_until_ready(out)

    ref = _reference(h, w, a, adj_bool, out_dim)
    assert out.shape == (N, out_dim)
    assert jnp.allclose(out, ref, atol=2e-3, rtol=2e-3), "mismatch vs JAX reference"

    print("KERNEL_OK")
</pallas_src>

<mosaic_0001>
module attributes {stable_mosaic.version = 11 : i64} {
  func.func @project_kernel(%arg0: i32, %arg1: memref<128x16xf32, #tpu.memory_space<vmem>>, %arg2: memref<16x128xf32, #tpu.memory_space<vmem>>, %arg3: memref<1x128xf32, #tpu.memory_space<vmem>>, %arg4: memref<1x128xf32, #tpu.memory_space<vmem>>, %arg5: memref<128x128xf32, #tpu.memory_space<vmem>>, %arg6: memref<128x1xf32, #tpu.memory_space<vmem>>, %arg7: memref<128x1xf32, #tpu.memory_space<vmem>>) attributes {dimension_semantics = [#tpu.dimension_semantics<parallel>], iteration_bounds = array<i64: 2>, scalar_prefetch = 0 : i64, scratch_operands = 0 : i64, tpu.core_type = #tpu.core_type<tc>, window_params = [{transform_indices = @transform_0, window_bounds = array<i64: 128, 16>}, {pipeline_mode = #tpu.pipeline_mode<synchronous>, transform_indices = @transform_1, window_bounds = array<i64: 16, 128>}, {pipeline_mode = #tpu.pipeline_mode<synchronous>, transform_indices = @transform_2, window_bounds = array<i64: 1, 128>}, {pipeline_mode = #tpu.pipeline_mode<synchronous>, transform_indices = @transform_3, window_bounds = array<i64: 1, 128>}, {transform_indices = @transform_4, window_bounds = array<i64: 128, 128>}, {transform_indices = @transform_5, window_bounds = array<i64: 128, 1>}, {transform_indices = @transform_6, window_bounds = array<i64: 128, 1>}]} {
    %c0 = arith.constant 0 : index
    %c0_0 = arith.constant 0 : index
    %0 = vector.load %arg1[%c0, %c0_0] : memref<128x16xf32, #tpu.memory_space<vmem>>, vector<128x16xf32>
    %c0_1 = arith.constant 0 : index
    %c0_2 = arith.constant 0 : index
    %1 = vector.load %arg2[%c0_1, %c0_2] : memref<16x128xf32, #tpu.memory_space<vmem>>, vector<16x128xf32>
    %cst = arith.constant dense<0.000000e+00> : vector<128x128xf32>
    %2 = tpu.matmul %0, %1, %cst {dimension_numbers = #tpu.dot_dimension_numbers<[1], [0], [0], [1], [0, 0, 1, 1], [], []>, precision = #tpu.contract_precision<fp32>} : vector<128x16xf32>, vector<16x128xf32>, vector<128x128xf32> -> vector<128x128xf32>
    %c0_3 = arith.constant 0 : index
    %c0_4 = arith.constant 0 : index
    %3 = vector.load %arg5[%c0_3, %c0_4] : memref<128x128xf32, #tpu.memory_space<vmem>>, vector<128x128xf32>
    tpu.vector_store %arg5[%c0_3, %c0_4], %2 {strides = array<i32>} : memref<128x128xf32, #tpu.memory_space<vmem>>, vector<128x128xf32>,
    %c0_5 = arith.constant 0 : index
    %c0_6 = arith.constant 0 : index
    %4 = vector.load %arg3[%c0_5, %c0_6] : memref<1x128xf32, #tpu.memory_space<vmem>>, vector<1x128xf32>
    %5 = vector.broadcast %4 : vector<1x128xf32> to vector<128x128xf32>
    %6 = arith.mulf %2, %5 : vector<128x128xf32>
    %cst_7 = arith.constant dense<0.000000e+00> : vector<128xf32>
    %7 = vector.multi_reduction <add>, %6, %cst_7 [1] : vector<128x128xf32> to vector<128xf32>
    %8 = vector.shape_cast %7 : vector<128xf32> to vector<128x1xf32>
    %c0_8 = arith.constant 0 : index
    %c0_9 = arith.constant 0 : index
    %9 = vector.load %arg6[%c0_8, %c0_9] : memref<128x1xf32, #tpu.memory_space<vmem>>, vector<128x1xf32>
    tpu.vector_store %arg6[%c0_8, %c0_9], %8 {strides = array<i32>} : memref<128x1xf32, #tpu.memory_space<vmem>>, vector<128x1xf32>,
    %c0_10 = arith.constant 0 : index
    %c0_11 = arith.constant 0 : index
    %10 = vector.load %arg4[%c0_10, %c0_11] : memref<1x128xf32, #tpu.memory_space<vmem>>, vector<1x128xf32>
    %11 = vector.broadcast %10 : vector<1x128xf32> to vector<128x128xf32>
    %12 = arith.mulf %2, %11 : vector<128x128xf32>
    %cst_12 = arith.constant dense<0.000000e+00> : vector<128xf32>
    %13 = vector.multi_reduction <add>, %12, %cst_12 [1] : vector<128x128xf32> to vector<128xf32>
    %14 = vector.shape_cast %13 : vector<128xf32> to vector<128x1xf32>
    %c0_13 = arith.constant 0 : index
    %c0_14 = arith.constant 0 : index
    %15 = vector.load %arg7[%c0_13, %c0_14] : memref<128x1xf32, #tpu.memory_space<vmem>>, vector<128x1xf32>
    tpu.vector_store %arg7[%c0_13, %c0_14], %14 {strides = array<i32>} : memref<128x1xf32, #tpu.memory_space<vmem>>, vector<128x1xf32>,
    return
  }
  func.func @transform_0(%arg0: i32) -> (i32, i32) {
    %c0_i32 = arith.constant 0 : i32
    %c0_i32_0 = arith.constant 0 : i32
    return %arg0, %c0_i32 : i32, i32
  }
  func.func @transform_1(%arg0: i32) -> (i32, i32) {
    %c0_i32 = arith.constant 0 : i32
    %c0_i32_0 = arith.constant 0 : i32
    %c0_i32_1 = arith.constant 0 : i32
    return %c0_i32, %c0_i32_0 : i32, i32
  }
  func.func @transform_2(%arg0: i32) -> (i32, i32) {
    %c0_i32 = arith.constant 0 : i32
    %c0_i32_0 = arith.constant 0 : i32
    %c0_i32_1 = arith.constant 0 : i32
    return %c0_i32, %c0_i32_0 : i32, i32
  }
  func.func @transform_3(%arg0: i32) -> (i32, i32) {
    %c0_i32 = arith.constant 0 : i32
    %c0_i32_0 = arith.constant 0 : i32
    %c0_i32_1 = arith.constant 0 : i32
    return %c0_i32, %c0_i32_0 : i32, i32
  }
  func.func @transform_4(%arg0: i32) -> (i32, i32) {
    %c0_i32 = arith.constant 0 : i32
    %c0_i32_0 = arith.constant 0 : i32
    return %arg0, %c0_i32 : i32, i32
  }
  func.func @transform_5(%arg0: i32) -> (i32, i32) {
    %c0_i32 = arith.constant 0 : i32
    %c0_i32_0 = arith.constant 0 : i32
    return %arg0, %c0_i32 : i32, i32
  }
  func.func @transform_6(%arg0: i32) -> (i32, i32) {
    %c0_i32 = arith.constant 0 : i32
    %c0_i32_0 = arith.constant 0 : i32
    return %arg0, %c0_i32 : i32, i32
  }
}

</mosaic_0001>

<llo_original>
// kernel: tpu_custom_call.1
$region0: #{tpu_custom_call.1}
  #allocation0 [shape = 'u32[]', space=smem, size = 0x4, offset = 0x4, fixed_abs, tag = 'smem constant byte address 0x4 - core index']
  #allocation1 [shape = 'u32[144,128]{1,0:T(1,128)}', space=vmem, size = 0x12000, scoped, tag = 'internal scratch']
  %s0 = inlined_call_operand.vmem [shape: f32[256,16], index: 0, kind: input, shape index: {}]
  %s1 = inlined_call_operand.vmem [shape: f32[16,128], index: 1, kind: input, shape index: {}]
  %s2 = inlined_call_operand.vmem [shape: f32[1,128], index: 2, kind: input, shape index: {}]
  %s3 = inlined_call_operand.vmem [shape: f32[1,128], index: 3, kind: input, shape index: {}]
  %s4 = inlined_call_operand.hbm [shape: f32[256,128], index: 4, kind: output, shape index: {0}]
  %s5 = inlined_call_operand.vmem [shape: f32[256,1], index: 5, kind: output, shape index: {1}]
  %s6 = inlined_call_operand.vmem [shape: f32[256,1], index: 6, kind: output, shape index: {2}]
  %7 = xla_tuple %s4, %s5, %s6
  %s8 = sld [smem:[#allocation0]]
  $region65: #{tpu_custom_call.1} parent=0
    _
  %s10 = ssub.s32 1, %s8
  %s11 = scalar_select 0, %s10, %s8
  $region1: #{tpu_custom_call.1} parent=0
    #allocation2 [shape = 'u8[131072]{0}', space=vmem, size = 0x20000, scoped, tag = 'output window, operand 0']
    #allocation3 [shape = 's32[2]{0}', space=sflag, size = 0x8, scoped, tag = 'scoped memory for tpu_custom_call.1']
    %12 = vsyncpa [#allocation3], 0
    %s13 = scalar_lea.sflag [#allocation3], 1
    %14 = vsyncpa %s13, 0
    loop: start=0, step=1, limit=4
    $region2: #{tpu_custom_call.1} parent=1 // loop_pre_header
      _
    $region3: #{tpu_custom_call.1} parent=1 // loop_header
      %s16 = sphi 0, %s20
      %p17 = scmp.ge.s32.totalorder %s16, 4
      %s26 = sphi 0, %s28
      %s29 = sphi 0, %s26
      %s30 = sphi 0, %s29
      %s46 = sphi 0, %s30
      %s50 = sphi 0, %s50
      %s52 = sphi 0, %s50
      %s53 = sphi 0, %s52
      %s67 = sphi 0, %s53
      %s71 = sphi 0, %s71
      %s73 = sphi 0, %s71
      %s74 = sphi 0, %s73
      %s88 = sphi 0, %s74
      %s92 = sphi 0, %s92
      %s94 = sphi 0, %s92
      %s95 = sphi 0, %s94
      %s109 = sphi 0, %s95
      %s115 = sphi 0, %s117
      %s118 = sphi 0, %s115
      %s119 = sphi 0, %s118
      %s135 = sphi 0, %s119
      %s141 = sphi 0, %s143
      %s144 = sphi 0, %s141
      %s145 = sphi 0, %s144
      %s161 = sphi 0, %s145
      %s167 = sphi 0, %s169
      %s170 = sphi 0, %s167
      %s171 = sphi 0, %s170
      %s187 = sphi 0, %s171
    $region4: #{tpu_custom_call.1} parent=1 // loop_header_branch
      %19 = sbr.rel (%p17) target = $region8
    $region5: #{tpu_custom_call.1} parent=1 // loop_body
      %s21 = ssub.s32 %s16, 1
      %s22 = ssub.s32 %s16, 2
      %s23 = sadd.s32 %s16, 1
      %s24 = ssub.s32 %s16, %s23
      %p25 = scmp.eq.s32.totalorder %s24, 0
      %s27 = sadd.s32 %s26, 1
      %s28 = scalar_select %p25, %s26, %s27
      %p31 = pneg %p25
      %p32 = scmp.eq.s32.totalorder %s16, 1
      %p33 = por %p31, %p32
      %p34 = scmp.ne.s32.totalorder %s26, %s29
      %p35 = scmp.eq.s32.totalorder %s16, 0
      %p36 = por %p34, %p35
      %p37 = scmp.ne.s32.totalorder %s26, %s29
      %p38 = scmp.eq.s32.totalorder %s21, 1
      %p39 = por %p37, %p38
      %p40 = scmp.ne.s32.totalorder %s29, %s30
      %p41 = scmp.eq.s32.totalorder %s21, 0
      %p42 = por %p40, %p41
      %p43 = scmp.ne.s32.totalorder %s29, %s30
      %p44 = scmp.eq.s32.totalorder %s22, 1
      %p45 = por %p43, %p44
      %p47 = scmp.ne.s32.totalorder %s30, %s46
      %p48 = scmp.eq.s32.totalorder %s22, 0
      %p49 = por %p47, %p48
      %s51 = sadd.s32 %s50, 1
      %p54 = scmp.eq.s32.totalorder %s16, 1
      %p55 = scmp.ne.s32.totalorder %s50, %s52
      %p56 = scmp.eq.s32.totalorder %s16, 0
      %p57 = por %p55, %p56
      %p58 = scmp.ne.s32.totalorder %s50, %s52
      %p59 = scmp.eq.s32.totalorder %s21, 1
      %p60 = por %p58, %p59
      %p61 = scmp.ne.s32.totalorder %s52, %s53
      %p62 = scmp.eq.s32.totalorder %s21, 0
      %p63 = por %p61, %p62
      %p64 = scmp.ne.s32.totalorder %s52, %s53
      %p65 = scmp.eq.s32.totalorder %s22, 1
      %p66 = por %p64, %p65
      %p68 = scmp.ne.s32.totalorder %s53, %s67
      %p69 = scmp.eq.s32.totalorder %s22, 0
      %p70 = por %p68, %p69
      %s72 = sadd.s32 %s71, 1
      %p75 = scmp.eq.s32.totalorder %s16, 1
      %p76 = scmp.ne.s32.totalorder %s71, %s73
      %p77 = scmp.eq.s32.totalorder %s16, 0
      %p78 = por %p76, %p77
      %p79 = scmp.ne.s32.totalorder %s71, %s73
      %p80 = scmp.eq.s32.totalorder %s21, 1
      %p81 = por %p79, %p80
      %p82 = scmp.ne.s32.totalorder %s73, %s74
      %p83 = scmp.eq.s32.totalorder %s21, 0
      %p84 = por %p82, %p83
      %p85 = scmp.ne.s32.totalorder %s73, %s74
      %p86 = scmp.eq.s32.totalorder %s22, 1
      %p87 = por %p85, %p86
      %p89 = scmp.ne.s32.totalorder %s74, %s88
      %p90 = scmp.eq.s32.totalorder %s22, 0
      %p91 = por %p89, %p90
      %s93 = sadd.s32 %s92, 1
      %p96 = scmp.eq.s32.totalorder %s16, 1
      %p97 = scmp.ne.s32.totalorder %s92, %s94
      %p98 = scmp.eq.s32.totalorder %s16, 0
      %p99 = por %p97, %p98
      %p100 = scmp.ne.s32.totalorder %s92, %s94
      %p101 = scmp.eq.s32.totalorder %s21, 1
      %p102 = por %p100, %p101
      %p103 = scmp.ne.s32.totalorder %s94, %s95
      %p104 = scmp.eq.s32.totalorder %s21, 0
      %p105 = por %p103, %p104
      %p106 = scmp.ne.s32.totalorder %s94, %s95
      %p107 = scmp.eq.s32.totalorder %s22, 1
      %p108 = por %p106, %p107
      %p110 = scmp.ne.s32.totalorder %s95, %s109
      %p111 = scmp.eq.s32.totalorder %s22, 0
      %p112 = por %p110, %p111
      %s113 = ssub.s32 %s16, %s23
      %p114 = scmp.eq.s32.totalorder %s113, 0
      %s116 = sadd.s32 %s115, 1
      %s117 = scalar_select %p114, %s115, %s116
      %p120 = pneg %p114
      %p121 = scmp.eq.s32.totalorder %s16, 1
      %p122 = por %p120, %p121
      %p123 = scmp.ne.s32.totalorder %s115, %s118
      %p124 = scmp.eq.s32.totalorder %s16, 0
      %p125 = por %p123, %p124
      %p126 = scmp.ne.s32.totalorder %s115, %s118
      %p127 = scmp.eq.s32.totalorder %s21, 1
      %p128 = por %p126, %p127
      %p129 = scmp.ne.s32.totalorder %s118, %s119
      %p130 = scmp.eq.s32.totalorder %s21, 0
      %p131 = por %p129, %p130
      %p132 = scmp.ne.s32.totalorder %s118, %s119
      %p133 = scmp.eq.s32.totalorder %s22, 1
      %p134 = por %p132, %p133
      %p136 = scmp.ne.s32.totalorder %s119, %s135
      %p137 = scmp.eq.s32.totalorder %s22, 0
      %p138 = por %p136, %p137
      %s139 = ssub.s32 %s16, %s23
      %p140 = scmp.eq.s32.totalorder %s139, 0
      %s142 = sadd.s32 %s141, 1
      %s143 = scalar_select %p140, %s141, %s142
      %p146 = pneg %p140
      %p147 = scmp.eq.s32.totalorder %s16, 1
      %p148 = por %p146, %p147
      %p149 = scmp.ne.s32.totalorder %s141, %s144
      %p150 = scmp.eq.s32.totalorder %s16, 0
      %p151 = por %p149, %p150
      %p152 = scmp.ne.s32.totalorder %s141, %s144
      %p153 = scmp.eq.s32.totalorder %s21, 1
      %p154 = por %p152, %p153
      %p155 = scmp.ne.s32.totalorder %s144, %s145
      %p156 = scmp.eq.s32.totalorder %s21, 0
      %p157 = por %p155, %p156
      %p158 = scmp.ne.s32.totalorder %s144, %s145
      %p159 = scmp.eq.s32.totalorder %s22, 1
      %p160 = por %p158, %p159
      %p162 = scmp.ne.s32.totalorder %s145, %s161
      %p163 = scmp.eq.s32.totalorder %s22, 0
      %p164 = por %p162, %p163
      %s165 = ssub.s32 %s16, %s23
      %p166 = scmp.eq.s32.totalorder %s165, 0
      %s168 = sadd.s32 %s167, 1
      %s169 = scalar_select %p166, %s167, %s168
      %p172 = pneg %p166
      %p173 = scmp.eq.s32.totalorder %s16, 1
      %p174 = por %p172, %p173
      %p175 = scmp.ne.s32.totalorder %s167, %s170
      %p176 = scmp.eq.s32.totalorder %s16, 0
      %p177 = por %p175, %p176
      %p178 = scmp.ne.s32.totalorder %s167, %s170
      %p179 = scmp.eq.s32.totalorder %s21, 1
      %p180 = por %p178, %p179
      %p181 = scmp.ne.s32.totalorder %s170, %s171
      %p182 = scmp.eq.s32.totalorder %s21, 0
      %p183 = por %p181, %p182
      %p184 = scmp.ne.s32.totalorder %s170, %s171
      %p185 = scmp.eq.s32.totalorder %s22, 1
      %p186 = por %p184, %p185
      %p188 = scmp.ne.s32.totalorder %s171, %s187
      %p189 = scmp.eq.s32.totalorder %s22, 0
      %p190 = por %p188, %p189
      %p191 = scmp.le.s32.totalorder 1, %s16
      %p192 = scmp.lt.s32.totalorder %s16, 3
      %p193 = pnand %p191, %p192
      %p194 = pneg %p193
      // Predicated region
      $region9: #{tpu_custom_call.1} parent=5 // pred_check
        _
      $region10: #{tpu_custom_call.1} parent=5 // pred_check_branch
        %196 = sbr.rel (%p193) target = $region12
      $region11: #{tpu_custom_call.1} parent=5 // pred_region
        %s197 = ssub.s32 %s16, 1
        // Predicated region
        $region13: #{tpu_custom_call.1} parent=11 // pred_check
          %p198 = pneg %p63
        $region14: #{tpu_custom_call.1} parent=11 // pred_check_branch
          %200 = sbr.rel (%p198) target = $region16
        $region15: #{tpu_custom_call.1} parent=11 // pred_region
          _
        $region16: #{tpu_custom_call.1} parent=11 // pred_fallthru
          _
        // Predicated region
        $region17: #{tpu_custom_call.1} parent=11 // pred_check
          %p201 = pneg %p84
        $region18: #{tpu_custom_call.1} parent=11 // pred_check_branch
          %203 = sbr.rel (%p201) target = $region20
        $region19: #{tpu_custom_call.1} parent=11 // pred_region
          _
        $region20: #{tpu_custom_call.1} parent=11 // pred_fallthru
          _
        // Predicated region
        $region21: #{tpu_custom_call.1} parent=11 // pred_check
          %p204 = pneg %p105
        $region22: #{tpu_custom_call.1} parent=11 // pred_check_branch
          %206 = sbr.rel (%p204) target = $region24
        $region23: #{tpu_custom_call.1} parent=11 // pred_region
          _
        $region24: #{tpu_custom_call.1} parent=11 // pred_fallthru
          _
      $region12: #{tpu_custom_call.1} parent=5 // pred_fallthru
        _
      %p207 = scmp.lt.s32.totalorder %s16, 2
      // Predicated region
      $region25: #{tpu_custom_call.1} parent=5 // pred_check
        %p208 = pneg %p207
      $region26: #{tpu_custom_call.1} parent=5 // pred_check_branch
        %210 = sbr.rel (%p208) target = $region28
      $region27: #{tpu_custom_call.1} parent=5 // pred_region
        // Predicated region
        $region29: #{tpu_custom_call.1} parent=27 // pred_check
          %p211 = pneg %p36
        $region30: #{tpu_custom_call.1} parent=27 // pred_check_branch
          %213 = sbr.rel (%p211) target = $region32
        $region31: #{tpu_custom_call.1} parent=27 // pred_region
          %s214 = smul.u32 16, %s16
          %p215 = scmp.lt.s32.totalorder %s214, 31
          %s216 = scalar_select %p215, %s214, 31
          %s217 = smul.addr %s216, 8
          %s218 = scalar_lea.vmem %s0, %s217
          %s219 = smul.u32 16, %s16
        $region32: #{tpu_custom_call.1} parent=27 // pred_fallthru
          _
      $region28: #{tpu_custom_call.1} parent=5 // pred_fallthru
        _
      %p220 = scmp.le.s32.totalorder 1, %s16
      %p221 = scmp.lt.s32.totalorder %s16, 3
      %p222 = pnand %p220, %p221
      %p223 = pneg %p222
      // Predicated region
      $region33: #{tpu_custom_call.1} parent=5 // pred_check
        _
      $region34: #{tpu_custom_call.1} parent=5 // pred_check_branch
        %225 = sbr.rel (%p222) target = $region36
      $region35: #{tpu_custom_call.1} parent=5 // pred_region
        %s226 = ssub.s32 %s16, 1
        %s227 = smul.u32 16, %s21
        %p228 = scmp.lt.s32.totalorder %s227, 31
        %s229 = scalar_select %p228, %s227, 31
        %s230 = smul.addr %s229, 8
        %s231 = scalar_lea.vmem %s0, %s230
        %p232 = pneg %p42
        %p233 = pneg %p39
        %p234 = pneg %p63
        %p235 = pneg %p60
        %p236 = pneg %p84
        %p237 = pneg %p81
        %p238 = pneg %p105
        %p239 = pneg %p102
        %p240 = pneg %p131
        %p241 = pneg %p128
        %s242 = sand.u32 %s118, 1
        %s243 = scalar_lea.sflag [#allocation3], %s242
        %s244 = sand.u32 %s118, 1
        %s245 = smul.addr %s244, 128
        %s246 = scalar_lea.vmem [#allocation2], %s245
        %p247 = pneg %p157
        %p248 = pneg %p154
        %s249 = smul.u32 16, %s21
        %p250 = scmp.lt.s32.totalorder %s249, 31
        %s251 = scalar_select %p250, %s249, 31
        %s252 = smul.addr %s251, 8
        %s253 = scalar_lea.vmem %s5, %s252
        %p254 = pneg %p183
        %p255 = pneg %p180
        %s256 = smul.u32 16, %s21
        %p257 = scmp.lt.s32.totalorder %s256, 31
        %s258 = scalar_select %p257, %s256, 31
        %s259 = smul.addr %s258, 8
        %s260 = scalar_lea.vmem %s6, %s259
        %s261 = smul.u32 16, %s21
        %p262 = scmp.lt.s32.totalorder %s261, 31
        %s263 = scalar_select %p262, %s261, 31
        %s264 = smul.addr %s263, 8
        %s265 = scalar_lea.vmem %s0, %s264
        %s266 = smul.u32 16, %s21
        %s267 = smul.u32 16, %s21
        %s268 = smul.u32 16, %s21
        %p269 = scmp.lt.s32.totalorder %s268, 31
        %s270 = scalar_select %p269, %s268, 31
        %s271 = smul.addr %s270, 8
        %s272 = scalar_lea.vmem %s5, %s271
        %s273 = smul.u32 16, %s21
        %s274 = smul.u32 16, %s21
        %p275 = scmp.lt.s32.totalorder %s274, 31
        %s276 = scalar_select %p275, %s274, 31
        %s277 = smul.addr %s276, 8
        %s278 = scalar_lea.vmem %s6, %s277
        %s279 = smul.u32 16, %s21
        %v280 = vld [vmem:[%s265] sm:$0xff]
        %v281 = vld [vmem:[%s265 + $0x8] sm:$0xff]
        %v282 = vld [vmem:[%s265 + $0x10] sm:$0xff]
        %v283 = vld [vmem:[%s265 + $0x18] sm:$0xff]
        %v284 = vld [vmem:[%s265 + $0x20] sm:$0xff]
        %v285 = vld [vmem:[%s265 + $0x28] sm:$0xff]
        %v286 = vld [vmem:[%s265 + $0x30] sm:$0xff]
        %v287 = vld [vmem:[%s265 + $0x38] sm:$0xff]
        %v288 = vld [vmem:[%s265 + $0x40] sm:$0xff]
        %v289 = vld [vmem:[%s265 + $0x48] sm:$0xff]
        %v290 = vld [vmem:[%s265 + $0x50] sm:$0xff]
        %v291 = vld [vmem:[%s265 + $0x58] sm:$0xff]
        %v292 = vld [vmem:[%s265 + $0x60] sm:$0xff]
        %v293 = vld [vmem:[%s265 + $0x68] sm:$0xff]
        %v294 = vld [vmem:[%s265 + $0x70] sm:$0xff]
        %v295 = vld [vmem:[%s265 + $0x78] sm:$0xff]
        %v296 = vld [vmem:[%s1] sm:$0xff]
        %v297 = vld [vmem:[%s1 + $0x8] sm:$0xff]
        %vm298 = vcmask 130048
        %v300 = vsel %vm298, %v280, 0
        %v303 = vsel %vm298, %v281, 0
        %v306 = vsel %vm298, %v282, 0
        %v309 = vsel %vm298, %v283, 0
        %v312 = vsel %vm298, %v284, 0
        %v315 = vsel %vm298, %v285, 0
        %v318 = vsel %vm298, %v286, 0
        %v321 = vsel %vm298, %v287, 0
        %v324 = vsel %vm298, %v288, 0
        %v327 = vsel %vm298, %v289, 0
        %v330 = vsel %vm298, %v290, 0
        %v333 = vsel %vm298, %v291, 0
        %v336 = vsel %vm298, %v292, 0
        %v339 = vsel %vm298, %v293, 0
        %v342 = vsel %vm298, %v294, 0
        %v345 = vsel %vm298, %v295, 0
        %347 = vmatprep.subr.mxu0 0.0
        %v348 = vand.u32 %v296, 4294901760
        %349 = vmatpush1.msra.mxu0 %v348
        %350 = vmatprep.subr.mxu0 0.0
        %v351 = vand.u32 %v297, 4294901760
        %352 = vmatpush1.msra.mxu0 %v351
        %353 = vmatprep.subr.mxu0 0.0
        %354 = vmatpush1.msra.mxu0 0.0
        %355 = vmatprep.subr.mxu0 0.0
        %356 = vmatpush1.msra.mxu0 0.0
        %357 = vmatprep.subr.mxu0 0.0
        %358 = vmatpush1.msra.mxu0 0.0
        %359 = vmatprep.subr.mxu0 0.0
        %360 = vmatpush1.msra.mxu0 0.0
        %361 = vmatprep.subr.mxu0 0.0
        %362 = vmatpush1.msra.mxu0 0.0
        %363 = vmatprep.subr.mxu0 0.0
        %364 = vmatpush1.msra.mxu0 0.0
        %365 = vmatprep.subr.mxu0 0.0
        %366 = vmatpush1.msra.mxu0 0.0
        %367 = vmatprep.subr.mxu0 0.0
        %368 = vmatpush1.msra.mxu0 0.0
        %369 = vmatprep.subr.mxu0 0.0
        %370 = vmatpush1.msra.mxu0 0.0
        %371 = vmatprep.subr.mxu0 0.0
        %372 = vmatpush1.msra.mxu0 0.0
        %373 = vmatprep.subr.mxu0 0.0
        %374 = vmatpush1.msra.mxu0 0.0
        %375 = vmatprep.subr.mxu0 0.0
        %376 = vmatpush1.msra.mxu0 0.0
        %377 = vmatprep.subr.mxu0 0.0
        %378 = vmatpush1.msra.mxu0 0.0
        %379 = vmatprep.subr.mxu0 0.0
        %380 = vmatpush1.msra.mxu0 0.0
        %381 = vmatprep.subr.mxu0 0.0
        %382 = vmatpush1.msra.mxu0 0.0
        %383 = vmatprep.subr.mxu0 0.0
        %384 = vmatpush1.msra.mxu0 0.0
        %385 = vmatprep.subr.mxu0 0.0
        %386 = vmatpush1.msra.mxu0 0.0
        %387 = vmatprep.subr.mxu0 0.0
        %388 = vmatpush1.msra.mxu0 0.0
        %389 = vmatprep.subr.mxu0 0.0
        %390 = vmatpush1.msra.mxu0 0.0
        %391 = vmatprep.subr.mxu0 0.0
        %392 = vmatpush1.msra.mxu0 0.0
        %393 = vmatprep.subr.mxu0 0.0
        %394 = vmatpush1.msra.mxu0 0.0
        %395 = vmatprep.subr.mxu0 0.0
        %396 = vmatpush1.msra.mxu0 0.0
        %397 = vmatprep.subr.mxu0 0.0
        %398 = vmatpush1.msra.mxu0 0.0
        %399 = vmatprep.subr.mxu0 0.0
        %400 = vmatpush1.msra.mxu0 0.0
        %401 = vmatprep.subr.mxu0 0.0
        %402 = vmatpush1.msra.mxu0 0.0
        %403 = vmatprep.subr.mxu0 0.0
        %404 = vmatpush1.msra.mxu0 0.0
        %405 = vmatprep.subr.mxu0 0.0
        %406 = vmatpush1.msra.mxu0 0.0
        %407 = vmatprep.subr.mxu0 0.0
        %408 = vmatpush1.msra.mxu0 0.0
        %409 = vmatprep.subr.mxu0 0.0
        %410 = vmatpush1.msra.mxu0 0.0
        %411 = vmatprep.subr.mxu0 0.0
        %412 = vmatpush1.msra.mxu0 0.0
        %413 = vmatprep.mubr.f32.mxu0 0.0
        %v414 = vand.u32 %v300, 4294901760
        %v415 = vsub.f32 %v300, %v414
        %v416 = vand.u32 %v415, 4294901760
        %v417 = vsub.f32 %v415, %v416
        %v418 = vand.u32 %v417, 4294901760
        %419 = vmatmul.mubr.f32.gmra.mrb[0].mxu0 %v418
        %v420 = vpop.f32.mrb[0].mxu0
        %v421 = vadd.f32 0.0, %v420
        %v422 = vpop.f32.mrb[0].mxu0
        %423 = vmatprep.mubr.f32.mxu0 0.0
        %v424 = vand.u32 %v303, 4294901760
        %v425 = vsub.f32 %v303, %v424
        %v426 = vand.u32 %v425, 4294901760
        %v427 = vsub.f32 %v425, %v426
        %v428 = vand.u32 %v427, 4294901760
        %429 = vmatmul.mubr.f32.gmra.mrb[0].mxu0 %v428
        %v430 = vpop.f32.mrb[0].mxu0
        %v431 = vadd.f32 0.0, %v430
        %v432 = vpop.f32.mrb[0].mxu0
        %433 = vmatprep.mubr.f32.mxu0 0.0
        %v434 = vand.u32 %v306, 4294901760
        %v435 = vsub.f32 %v306, %v434
        %v436 = vand.u32 %v435, 4294901760
        %v437 = vsub.f32 %v435, %v436
        %v438 = vand.u32 %v437, 4294901760
        %439 = vmatmul.mubr.f32.gmra.mrb[0].mxu0 %v438
        %v440 = vpop.f32.mrb[0].mxu0
        %v441 = vadd.f32 0.0, %v440
        %v442 = vpop.f32.mrb[0].mxu0
        %443 = vmatprep.mubr.f32.mxu0 0.0
        %v444 = vand.u32 %v309, 4294901760
        %v445 = vsub.f32 %v309, %v444
        %v446 = vand.u32 %v445, 4294901760
        %v447 = vsub.f32 %v445, %v446
        %v448 = vand.u32 %v447, 4294901760
        %449 = vmatmul.mubr.f32.gmra.mrb[0].mxu0 %v448
        %v450 = vpop.f32.mrb[0].mxu0
        %v451 = vadd.f32 0.0, %v450
        %v452 = vpop.f32.mrb[0].mxu0
        %453 = vmatprep.mubr.f32.mxu0 0.0
        %v454 = vand.u32 %v312, 4294901760
        %v455 = vsub.f32 %v312, %v454
        %v456 = vand.u32 %v455, 4294901760
        %v457 = vsub.f32 %v455, %v456
        %v458 = vand.u32 %v457, 4294901760
        %459 = vmatmul.mubr.f32.gmra.mrb[0].mxu0 %v458
        %v460 = vpop.f32.mrb[0].mxu0
        %v461 = vadd.f32 0.0, %v460
        %v462 = vpop.f32.mrb[0].mxu0
        %463 = vmatprep.mubr.f32.mxu0 0.0
        %v464 = vand.u32 %v315, 4294901760
        %v465 = vsub.f32 %v315, %v464
        %v466 = vand.u32 %v465, 4294901760
        %v467 = vsub.f32 %v465, %v466
        %v468 = vand.u32 %v467, 4294901760
        %469 = vmatmul.mubr.f32.gmra.mrb[0].mxu0 %v468
        %v470 = vpop.f32.mrb[0].mxu0
        %v471 = vadd.f32 0.0, %v470
        %v472 = vpop.f32.mrb[0].mxu0
        %473 = vmatprep.mubr.f32.mxu0 0.0
        %v474 = vand.u32 %v318, 4294901760
        %v475 = vsub.f32 %v318, %v474
        %v476 = vand.u32 %v475, 4294901760
        %v477 = vsub.f32 %v475, %v476
        %v478 = vand.u32 %v477, 4294901760
        %479 = vmatmul.mubr.f32.gmra.mrb[0].mxu0 %v478
        %v480 = vpop.f32.mrb[0].mxu0
        %v481 = vadd.f32 0.0, %v480
        %v482 = vpop.f32.mrb[0].mxu0
        %483 = vmatprep.mubr.f32.mxu0 0.0
        %v484 = vand.u32 %v321, 4294901760
        %v485 = vsub.f32 %v321, %v484
        %v486 = vand.u32 %v485, 4294901760
        %v487 = vsub.f32 %v485, %v486
        %v488 = vand.u32 %v487, 4294901760
        %489 = vmatmul.mubr.f32.gmra.mrb[0].mxu0 %v488
        %v490 = vpop.f32.mrb[0].mxu0
        %v491 = vadd.f32 0.0, %v490
        %v492 = vpop.f32.mrb[0].mxu0
        %493 = vmatprep.mubr.f32.mxu0 0.0
        %v494 = vand.u32 %v324, 4294901760
        %v495 = vsub.f32 %v324, %v494
        %v496 = vand.u32 %v495, 4294901760
        %v497 = vsub.f32 %v495, %v496
        %v498 = vand.u32 %v497, 4294901760
        %499 = vmatmul.mubr.f32.gmra.mrb[0].mxu0 %v498
        %v500 = vpop.f32.mrb[0].mxu0
        %v501 = vadd.f32 0.0, %v500
        %v502 = vpop.f32.mrb[0].mxu0
        %503 = vmatprep.mubr.f32.mxu0 0.0
        %v504 = vand.u32 %v327, 4294901760
        %v505 = vsub.f32 %v327, %v504
        %v506 = vand.u32 %v505, 4294901760
        %v507 = vsub.f32 %v505, %v506
        %v508 = vand.u32 %v507, 4294901760
        %509 = vmatmul.mubr.f32.gmra.mrb[0].mxu0 %v508
        %v510 = vpop.f32.mrb[0].mxu0
        %v511 = vadd.f32 0.0, %v510
        %v512 = vpop.f32.mrb[0].mxu0
        %513 = vmatprep.mubr.f32.mxu0 0.0
        %v514 = vand.u32 %v330, 4294901760
        %v515 = vsub.f32 %v330, %v514
        %v516 = vand.u32 %v515, 4294901760
        %v517 = vsub.f32 %v515, %v516
        %v518 = vand.u32 %v517, 4294901760
        %519 = vmatmul.mubr.f32.gmra.mrb[0].mxu0 %v518
        %v520 = vpop.f32.mrb[0].mxu0
        %v521 = vadd.f32 0.0, %v520
        %v522 = vpop.f32.mrb[0].mxu0
        %523 = vmatprep.mubr.f32.mxu0 0.0
        %v524 = vand.u32 %v333, 4294901760
        %v525 = vsub.f32 %v333, %v524
        %v526 = vand.u32 %v525, 4294901760
        %v527 = vsub.f32 %v525, %v526
        %v528 = vand.u32 %v527, 4294901760
        %529 = vmatmul.mubr.f32.gmra.mrb[0].mxu0 %v528
        %v530 = vpop.f32.mrb[0].mxu0
        %v531 = vadd.f32 0.0, %v530
        %v532 = vpop.f32.mrb[0].mxu0
        %533 = vmatprep.mubr.f32.mxu0 0.0
        %v534 = vand.u32 %v336, 4294901760
        %v535 = vsub.f32 %v336, %v534
        %v536 = vand.u32 %v535, 4294901760
        %v537 = vsub.f32 %v535, %v536
        %v538 = vand.u32 %v537, 4294901760
        %539 = vmatmul.mubr.f32.gmra.mrb[0].mxu0 %v538
        %v540 = vpop.f32.mrb[0].mxu0
        %v541 = vadd.f32 0.0, %v540
        %v542 = vpop.f32.mrb[0].mxu0
        %543 = vmatprep.mubr.f32.mxu0 0.0
        %v544 = vand.u32 %v339, 4294901760
        %v545 = vsub.f32 %v339, %v544
        %v546 = vand.u32 %v545, 4294901760
        %v547 = vsub.f32 %v545, %v546
        %v548 = vand.u32 %v547, 4294901760
        %549 = vmatmul.mubr.f32.gmra.mrb[0].mxu0 %v548
        %v550 = vpop.f32.mrb[0].mxu0
        %v551 = vadd.f32 0.0, %v550
        %v552 = vpop.f32.mrb[0].mxu0
        %553 = vmatprep.mubr.f32.mxu0 0.0
        %v554 = vand.u32 %v342, 4294901760
        %v555 = vsub.f32 %v342, %v554
        %v556 = vand.u32 %v555, 4294901760
        %v557 = vsub.f32 %v555, %v556
        %v558 = vand.u32 %v557, 4294901760
        %559 = vmatmul.mubr.f32.gmra.mrb[0].mxu0 %v558
        %v560 = vpop.f32.mrb[0].mxu0
        %v561 = vadd.f32 0.0, %v560
        %v562 = vpop.f32.mrb[0].mxu0
        %563 = vmatprep.mubr.f32.mxu0 0.0
        %v564 = vand.u32 %v345, 4294901760
        %v565 = vsub.f32 %v345, %v564
        %v566 = vand.u32 %v565, 4294901760
        %v567 = vsub.f32 %v565, %v566
        %v568 = vand.u32 %v567, 4294901760
        %569 = vmatmul.mubr.f32.gmra.mrb[0].mxu0 %v568
        %v570 = vpop.f32.mrb[0].mxu0
        %v571 = vadd.f32 0.0, %v570
        %v572 = vpop.f32.mrb[0].mxu0
        %573 = vdwg.mxu0
        %574 = vmatprep.subr.mxu0 0.0
        %v575 = vand.u32 %v296, 4294901760
        %v576 = vsub.f32 %v296, %v575
        %v577 = vand.u32 %v576, 4294901760
        %v578 = vsub.f32 %v576, %v577
        %v579 = vand.u32 %v578, 4294901760
        %580 = vmatpush1.msra.mxu0 %v579
        %581 = vmatprep.subr.mxu0 0.0
        %v582 = vand.u32 %v297, 4294901760
        %v583 = vsub.f32 %v297, %v582
        %v584 = vand.u32 %v583, 4294901760
        %v585 = vsub.f32 %v583, %v584
        %v586 = vand.u32 %v585, 4294901760
        %587 = vmatpush1.msra.mxu0 %v586
        %588 = vmatprep.subr.mxu0 0.0
        %589 = vmatpush1.msra.mxu0 0.0
        %590 = vmatprep.subr.mxu0 0.0
        %591 = vmatpush1.msra.mxu0 0.0
        %592 = vmatprep.subr.mxu0 0.0
        %593 = vmatpush1.msra.mxu0 0.0
        %594 = vmatprep.subr.mxu0 0.0
        %595 = vmatpush1.msra.mxu0 0.0
        %596 = vmatprep.subr.mxu0 0.0
        %597 = vmatpush1.msra.mxu0 0.0
        %598 = vmatprep.subr.mxu0 0.0
        %599 = vmatpush1.msra.mxu0 0.0
        %600 = vmatprep.subr.mxu0 0.0
        %601 = vmatpush1.msra.mxu0 0.0
        %602 = vmatprep.subr.mxu0 0.0
        %603 = vmatpush1.msra.mxu0 0.0
        %604 = vmatprep.subr.mxu0 0.0
        %605 = vmatpush1.msra.mxu0 0.0
        %606 = vmatprep.subr.mxu0 0.0
        %607 = vmatpush1.msra.mxu0 0.0
        %608 = vmatprep.subr.mxu0 0.0
        %609 = vmatpush1.msra.mxu0 0.0
        %610 = vmatprep.subr.mxu0 0.0
        %611 = vmatpush1.msra.mxu0 0.0
        %612 = vmatprep.subr.mxu0 0.0
        %613 = vmatpush1.msra.mxu0 0.0
        %614 = vmatprep.subr.mxu0 0.0
        %615 = vmatpush1.msra.mxu0 0.0
        %616 = vmatprep.subr.mxu0 0.0
        %617 = vmatpush1.msra.mxu0 0.0
        %618 = vmatprep.subr.mxu0 0.0
        %619 = vmatpush1.msra.mxu0 0.0
        %620 = vmatprep.subr.mxu0 0.0
        %621 = vmatpush1.msra.mxu0 0.0
        %622 = vmatprep.subr.mxu0 0.0
        %623 = vmatpush1.msra.mxu0 0.0
        %624 = vmatprep.subr.mxu0 0.0
        %625 = vmatpush1.msra.mxu0 0.0
        %626 = vmatprep.subr.mxu0 0.0
        %627 = vmatpush1.msra.mxu0 0.0
        %628 = vmatprep.subr.mxu0 0.0
        %629 = vmatpush1.msra.mxu0 0.0
        %630 = vmatprep.subr.mxu0 0.0
        %631 = vmatpush1.msra.mxu0 0.0
        %632 = vmatprep.subr.mxu0 0.0
        %633 = vmatpush1.msra.mxu0 0.0
        %634 = vmatprep.subr.mxu0 0.0
        %635 = vmatpush1.msra.mxu0 0.0
        %636 = vmatprep.subr.mxu0 0.0
        %637 = vmatpush1.msra.mxu0 0.0
        %638 = vmatprep.subr.mxu0 0.0
        %639 = vmatpush1.msra.mxu0 0.0
        %640 = vmatprep.subr.mxu0 0.0
        %641 = vmatpush1.msra.mxu0 0.0
        %642 = vmatprep.subr.mxu0 0.0
        %643 = vmatpush1.msra.mxu0 0.0
        %644 = vmatprep.subr.mxu0 0.0
        %645 = vmatpush1.msra.mxu0 0.0
        %646 = vmatprep.subr.mxu0 0.0
        %647 = vmatpush1.msra.mxu0 0.0
        %648 = vmatprep.mubr.f32.mxu0 0.0
        %v649 = vand.u32 %v300, 4294901760
        %650 = vmatmul.mubr.f32.gmra.mrb[0].mxu0 %v649
        %v651 = vpop.f32.mrb[0].mxu0
        %v652 = vadd.f32 %v421, %v651
        %v653 = vpop.f32.mrb[0].mxu0
        %654 = vmatprep.mubr.f32.mxu0 0.0
        %v655 = vand.u32 %v303, 4294901760
        %656 = vmatmul.mubr.f32.gmra.mrb[0].mxu0 %v655
        %v657 = vpop.f32.mrb[0].mxu0
        %v658 = vadd.f32 %v431, %v657
        %v659 = vpop.f32.mrb[0].mxu0
        %660 = vmatprep.mubr.f32.mxu0 0.0
        %v661 = vand.u32 %v306, 4294901760
        %662 = vmatmul.mubr.f32.gmra.mrb[0].mxu0 %v661
        %v663 = vpop.f32.mrb[0].mxu0
        %v664 = vadd.f32 %v441, %v663
        %v665 = vpop.f32.mrb[0].mxu0
        %666 = vmatprep.mubr.f32.mxu0 0.0
        %v667 = vand.u32 %v309, 4294901760
        %668 = vmatmul.mubr.f32.gmra.mrb[0].mxu0 %v667
        %v669 = vpop.f32.mrb[0].mxu0
        %v670 = vadd.f32 %v451, %v669
        %v671 = vpop.f32.mrb[0].mxu0
        %672 = vmatprep.mubr.f32.mxu0 0.0
        %v673 = vand.u32 %v312, 4294901760
        %674 = vmatmul.mubr.f32.gmra.mrb[0].mxu0 %v673
        %v675 = vpop.f32.mrb[0].mxu0
        %v676 = vadd.f32 %v461, %v675
        %v677 = vpop.f32.mrb[0].mxu0
        %678 = vmatprep.mubr.f32.mxu0 0.0
        %v679 = vand.u32 %v315, 4294901760
        %680 = vmatmul.mubr.f32.gmra.mrb[0].mxu0 %v679
        %v681 = vpop.f32.mrb[0].mxu0
        %v682 = vadd.f32 %v471, %v681
        %v683 = vpop.f32.mrb[0].mxu0
        %684 = vmatprep.mubr.f32.mxu0 0.0
        %v685 = vand.u32 %v318, 4294901760
        %686 = vmatmul.mubr.f32.gmra.mrb[0].mxu0 %v685
        %v687 = vpop.f32.mrb[0].mxu0
        %v688 = vadd.f32 %v481, %v687
        %v689 = vpop.f32.mrb[0].mxu0
        %690 = vmatprep.mubr.f32.mxu0 0.0
        %v691 = vand.u32 %v321, 4294901760
        %692 = vmatmul.mubr.f32.gmra.mrb[0].mxu0 %v691
        %v693 = vpop.f32.mrb[0].mxu0
        %v694 = vadd.f32 %v491, %v693
        %v695 = vpop.f32.mrb[0].mxu0
        %696 = vmatprep.mubr.f32.mxu0 0.0
        %v697 = vand.u32 %v324, 4294901760
        %698 = vmatmul.mubr.f32.gmra.mrb[0].mxu0 %v697
        %v699 = vpop.f32.mrb[0].mxu0
        %v700 = vadd.f32 %v501, %v699
        %v701 = vpop.f32.mrb[0].mxu0
        %702 = vmatprep.mubr.f32.mxu0 0.0
        %v703 = vand.u32 %v327, 4294901760
        %704 = vmatmul.mubr.f32.gmra.mrb[0].mxu0 %v703
        %v705 = vpop.f32.mrb[0].mxu0
        %v706 = vadd.f32 %v511, %v705
        %v707 = vpop.f32.mrb[0].mxu0
        %708 = vmatprep.mubr.f32.mxu0 0.0
        %v709 = vand.u32 %v330, 4294901760
        %710 = vmatmul.mubr.f32.gmra.mrb[0].mxu0 %v709
        %v711 = vpop.f32.mrb[0].mxu0
        %v712 = vadd.f32 %v521, %v711
        %v713 = vpop.f32.mrb[0].mxu0
        %714 = vmatprep.mubr.f32.mxu0 0.0
        %v715 = vand.u32 %v333, 4294901760
        %716 = vmatmul.mubr.f32.gmra.mrb[0].mxu0 %v715
        %v717 = vpop.f32.mrb[0].mxu0
        %v718 = vadd.f32 %v531, %v717
        %v719 = vpop.f32.mrb[0].mxu0
        %720 = vmatprep.mubr.f32.mxu0 0.0
        %v721 = vand.u32 %v336, 4294901760
        %722 = vmatmul.mubr.f32.gmra.mrb[0].mxu0 %v721
        %v723 = vpop.f32.mrb[0].mxu0
        %v724 = vadd.f32 %v541, %v723
        %v725 = vpop.f32.mrb[0].mxu0
        %726 = vmatprep.mubr.f32.mxu0 0.0
        %v727 = vand.u32 %v339, 4294901760
        %728 = vmatmul.mubr.f32.gmra.mrb[0].mxu0 %v727
        %v729 = vpop.f32.mrb[0].mxu0
        %v730 = vadd.f32 %v551, %v729
        %v731 = vpop.f32.mrb[0].mxu0
        %732 = vmatprep.mubr.f32.mxu0 0.0
        %v733 = vand.u32 %v342, 4294901760
        %734 = vmatmul.mubr.f32.gmra.mrb[0].mxu0 %v733
        %v735 = vpop.f32.mrb[0].mxu0
        %v736 = vadd.f32 %v561, %v735
        %v737 = vpop.f32.mrb[0].mxu0
        %738 = vmatprep.mubr.f32.mxu0 0.0
        %v739 = vand.u32 %v345, 4294901760
        %740 = vmatmul.mubr.f32.gmra.mrb[0].mxu0 %v739
        %v741 = vpop.f32.mrb[0].mxu0
        %v742 = vadd.f32 %v571, %v741
        %v743 = vpop.f32.mrb[0].mxu0
        %744 = vdwg.mxu0
        %745 = vmatprep.subr.mxu0 0.0
        %v746 = vand.u32 %v296, 4294901760
        %v747 = vsub.f32 %v296, %v746
        %748 = vmatpush1.msra.mxu0 %v747
        %749 = vmatprep.subr.mxu0 0.0
        %v750 = vand.u32 %v297, 4294901760
        %v751 = vsub.f32 %v297, %v750
        %752 = vmatpush1.msra.mxu0 %v751
        %753 = vmatprep.subr.mxu0 0.0
        %754 = vmatpush1.msra.mxu0 0.0
        %755 = vmatprep.subr.mxu0 0.0
        %756 = vmatpush1.msra.mxu0 0.0
        %757 = vmatprep.subr.mxu0 0.0
        %758 = vmatpush1.msra.mxu0 0.0
        %759 = vmatprep.subr.mxu0 0.0
        %760 = vmatpush1.msra.mxu0 0.0
        %761 = vmatprep.subr.mxu0 0.0
        %762 = vmatpush1.msra.mxu0 0.0
        %763 = vmatprep.subr.mxu0 0.0
        %764 = vmatpush1.msra.mxu0 0.0
        %765 = vmatprep.subr.mxu0 0.0
        %766 = vmatpush1.msra.mxu0 0.0
        %767 = vmatprep.subr.mxu0 0.0
        %768 = vmatpush1.msra.mxu0 0.0
        %769 = vmatprep.subr.mxu0 0.0
        %770 = vmatpush1.msra.mxu0 0.0
        %771 = vmatprep.subr.mxu0 0.0
        %772 = vmatpush1.msra.mxu0 0.0
        %773 = vmatprep.subr.mxu0 0.0
        %774 = vmatpush1.msra.mxu0 0.0
        %775 = vmatprep.subr.mxu0 0.0
        %776 = vmatpush1.msra.mxu0 0.0
        %777 = vmatprep.subr.mxu0 0.0
        %778 = vmatpush1.msra.mxu0 0.0
        %779 = vmatprep.subr.mxu0 0.0
        %780 = vmatpush1.msra.mxu0 0.0
        %781 = vmatprep.subr.mxu0 0.0
        %782 = vmatpush1.msra.mxu0 0.0
        %783 = vmatprep.subr.mxu0 0.0
        %784 = vmatpush1.msra.mxu0 0.0
        %785 = vmatprep.subr.mxu0 0.0
        %786 = vmatpush1.msra.mxu0 0.0
        %787 = vmatprep.subr.mxu0 0.0
        %788 = vmatpush1.msra.mxu0 0.0
        %789 = vmatprep.subr.mxu0 0.0
        %790 = vmatpush1.msra.mxu0 0.0
        %791 = vmatprep.subr.mxu0 0.0
        %792 = vmatpush1.msra.mxu0 0.0
        %793 = vmatprep.subr.mxu0 0.0
        %794 = vmatpush1.msra.mxu0 0.0
        %795 = vmatprep.subr.mxu0 0.0
        %796 = vmatpush1.msra.mxu0 0.0
        %797 = vmatprep.subr.mxu0 0.0
        %798 = vmatpush1.msra.mxu0 0.0
        %799 = vmatprep.subr.mxu0 0.0
        %800 = vmatpush1.msra.mxu0 0.0
        %801 = vmatprep.subr.mxu0 0.0
        %802 = vmatpush1.msra.mxu0 0.0
        %803 = vmatprep.subr.mxu0 0.0
        %804 = vmatpush1.msra.mxu0 0.0
        %805 = vmatprep.subr.mxu0 0.0
        %806 = vmatpush1.msra.mxu0 0.0
        %807 = vmatprep.subr.mxu0 0.0
        %808 = vmatpush1.msra.mxu0 0.0
        %809 = vmatprep.subr.mxu0 0.0
        %810 = vmatpush1.msra.mxu0 0.0
        %811 = vmatprep.subr.mxu0 0.0
        %812 = vmatpush1.msra.mxu0 0.0
        %813 = vmatprep.mubr.f32.mxu0 0.0
        %v814 = vand.u32 %v300, 4294901760
        %v815 = vsub.f32 %v300, %v814
        %816 = vmatmul.mubr.f32.gmra.mrb[0].mxu0 %v815
        %v817 = vpop.f32.mrb[0].mxu0
        %v818 = vadd.f32 %v652, %v817
        %v819 = vpop.f32.mrb[0].mxu0
        %820 = vmatprep.mubr.f32.mxu0 0.0
        %v821 = vand.u32 %v303, 4294901760
        %v822 = vsub.f32 %v303, %v821
        %823 = vmatmul.mubr.f32.gmra.mrb[0].mxu0 %v822
        %v824 = vpop.f32.mrb[0].mxu0
        %v825 = vadd.f32 %v658, %v824
        %v826 = vpop.f32.mrb[0].mxu0
        %827 = vmatprep.mubr.f32.mxu0 0.0
        %v828 = vand.u32 %v306, 4294901760
        %v829 = vsub.f32 %v306, %v828
        %830 = vmatmul.mubr.f32.gmra.mrb[0].mxu0 %v829
        %v831 = vpop.f32.mrb[0].mxu0
        %v832 = vadd.f32 %v664, %v831
        %v833 = vpop.f32.mrb[0].mxu0
        %834 = vmatprep.mubr.f32.mxu0 0.0
        %v835 = vand.u32 %v309, 4294901760
        %v836 = vsub.f32 %v309, %v835
        %837 = vmatmul.mubr.f32.gmra.mrb[0].mxu0 %v836
        %v838 = vpop.f32.mrb[0].mxu0
        %v839 = vadd.f32 %v670, %v838
        %v840 = vpop.f32.mrb[0].mxu0
        %841 = vmatprep.mubr.f32.mxu0 0.0
        %v842 = vand.u32 %v312, 4294901760
        %v843 = vsub.f32 %v312, %v842
        %844 = vmatmul.mubr.f32.gmra.mrb[0].mxu0 %v843
        %v845 = vpop.f32.mrb[0].mxu0
        %v846 = vadd.f32 %v676, %v845
        %v847 = vpop.f32.mrb[0].mxu0
        %848 = vmatprep.mubr.f32.mxu0 0.0
        %v849 = vand.u32 %v315, 4294901760
        %v850 = vsub.f32 %v315, %v849
        %851 = vmatmul.mubr.f32.gmra.mrb[0].mxu0 %v850
        %v852 = vpop.f32.mrb[0].mxu0
        %v853 = vadd.f32 %v682, %v852
        %v854 = vpop.f32.mrb[0].mxu0
        %855 = vmatprep.mubr.f32.mxu0 0.0
        %v856 = vand.u32 %v318, 4294901760
        %v857 = vsub.f32 %v318, %v856
        %858 = vmatmul.mubr.f32.gmra.mrb[0].mxu0 %v857
        %v859 = vpop.f32.mrb[0].mxu0
        %v860 = vadd.f32 %v688, %v859
        %v861 = vpop.f32.mrb[0].mxu0
        %862 = vmatprep.mubr.f32.mxu0 0.0
        %v863 = vand.u32 %v321, 4294901760
        %v864 = vsub.f32 %v321, %v863
        %865 = vmatmul.mubr.f32.gmra.mrb[0].mxu0 %v864
        %v866 = vpop.f32.mrb[0].mxu0
        %v867 = vadd.f32 %v694, %v866
        %v868 = vpop.f32.mrb[0].mxu0
        %869 = vmatprep.mubr.f32.mxu0 0.0
        %v870 = vand.u32 %v324, 4294901760
        %v871 = vsub.f32 %v324, %v870
        %872 = vmatmul.mubr.f32.gmra.mrb[0].mxu0 %v871
        %v873 = vpop.f32.mrb[0].mxu0
        %v874 = vadd.f32 %v700, %v873
        %v875 = vpop.f32.mrb[0].mxu0
        %876 = vmatprep.mubr.f32.mxu0 0.0
        %v877 = vand.u32 %v327, 4294901760
        %v878 = vsub.f32 %v327, %v877
        %879 = vmatmul.mubr.f32.gmra.mrb[0].mxu0 %v878
        %v880 = vpop.f32.mrb[0].mxu0
        %v881 = vadd.f32 %v706, %v880
        %v882 = vpop.f32.mrb[0].mxu0
        %883 = vmatprep.mubr.f32.mxu0 0.0
        %v884 = vand.u32 %v330, 4294901760
        %v885 = vsub.f32 %v330, %v884
        %886 = vmatmul.mubr.f32.gmra.mrb[0].mxu0 %v885
        %v887 = vpop.f32.mrb[0].mxu0
        %v888 = vadd.f32 %v712, %v887
        %v889 = vpop.f32.mrb[0].mxu0
        %890 = vmatprep.mubr.f32.mxu0 0.0
        %v891 = vand.u32 %v333, 4294901760
        %v892 = vsub.f32 %v333, %v891
        %893 = vmatmul.mubr.f32.gmra.mrb[0].mxu0 %v892
        %v894 = vpop.f32.mrb[0].mxu0
        %v895 = vadd.f32 %v718, %v894
        %v896 = vpop.f32.mrb[0].mxu0
        %897 = vmatprep.mubr.f32.mxu0 0.0
        %v898 = vand.u32 %v336, 4294901760
        %v899 = vsub.f32 %v336, %v898
        %900 = vmatmul.mubr.f32.gmra.mrb[0].mxu0 %v899
        %v901 = vpop.f32.mrb[0].mxu0
        %v902 = vadd.f32 %v724, %v901
        %v903 = vpop.f32.mrb[0].mxu0
        %904 = vmatprep.mubr.f32.mxu0 0.0
        %v905 = vand.u32 %v339, 4294901760
        %v906 = vsub.f32 %v339, %v905
        %907 = vmatmul.mubr.f32.gmra.mrb[0].mxu0 %v906
        %v908 = vpop.f32.mrb[0].mxu0
        %v909 = vadd.f32 %v730, %v908
        %v910 = vpop.f32.mrb[0].mxu0
        %911 = vmatprep.mubr.f32.mxu0 0.0
        %v912 = vand.u32 %v342, 4294901760
        %v913 = vsub.f32 %v342, %v912
        %914 = vmatmul.mubr.f32.gmra.mrb[0].mxu0 %v913
        %v915 = vpop.f32.mrb[0].mxu0
        %v916 = vadd.f32 %v736, %v915
        %v917 = vpop.f32.mrb[0].mxu0
        %918 = vmatprep.mubr.f32.mxu0 0.0
        %v919 = vand.u32 %v345, 4294901760
        %v920 = vsub.f32 %v345, %v919
        %921 = vmatmul.mubr.f32.gmra.mrb[0].mxu0 %v920
        %v922 = vpop.f32.mrb[0].mxu0
        %v923 = vadd.f32 %v742, %v922
        %v924 = vpop.f32.mrb[0].mxu0
        %925 = vdwg.mxu0
        %926 = vmatprep.subr.mxu0 0.0
        %v927 = vand.u32 %v296, 4294901760
        %928 = vmatpush1.msra.mxu0 %v927
        %929 = vmatprep.subr.mxu0 0.0
        %v930 = vand.u32 %v297, 4294901760
        %931 = vmatpush1.msra.mxu0 %v930
        %932 = vmatprep.subr.mxu0 0.0
        %933 = vmatpush1.msra.mxu0 0.0
        %934 = vmatprep.subr.mxu0 0.0
        %935 = vmatpush1.msra.mxu0 0.0
        %936 = vmatprep.subr.mxu0 0.0
        %937 = vmatpush1.msra.mxu0 0.0
        %938 = vmatprep.subr.mxu0 0.0
        %939 = vmatpush1.msra.mxu0 0.0
        %940 = vmatprep.subr.mxu0 0.0
        %941 = vmatpush1.msra.mxu0 0.0
        %942 = vmatprep.subr.mxu0 0.0
        %943 = vmatpush1.msra.mxu0 0.0
        %944 = vmatprep.subr.mxu0 0.0
        %945 = vmatpush1.msra.mxu0 0.0
        %946 = vmatprep.subr.mxu0 0.0
        %947 = vmatpush1.msra.mxu0 0.0
        %948 = vmatprep.subr.mxu0 0.0
        %949 = vmatpush1.msra.mxu0 0.0
        %950 = vmatprep.subr.mxu0 0.0
        %951 = vmatpush1.msra.mxu0 0.0
        %952 = vmatprep.subr.mxu0 0.0
        %953 = vmatpush1.msra.mxu0 0.0
        %954 = vmatprep.subr.mxu0 0.0
        %955 = vmatpush1.msra.mxu0 0.0
        %956 = vmatprep.subr.mxu0 0.0
        %957 = vmatpush1.msra.mxu0 0.0
        %958 = vmatprep.subr.mxu0 0.0
        %959 = vmatpush1.msra.mxu0 0.0
        %960 = vmatprep.subr.mxu0 0.0
        %961 = vmatpush1.msra.mxu0 0.0
        %962 = vmatprep.subr.mxu0 0.0
        %963 = vmatpush1.msra.mxu0 0.0
        %964 = vmatprep.subr.mxu0 0.0
        %965 = vmatpush1.msra.mxu0 0.0
        %966 = vmatprep.subr.mxu0 0.0
        %967 = vmatpush1.msra.mxu0 0.0
        %968 = vmatprep.subr.mxu0 0.0
        %969 = vmatpush1.msra.mxu0 0.0
        %970 = vmatprep.subr.mxu0 0.0
        %971 = vmatpush1.msra.mxu0 0.0
        %972 = vmatprep.subr.mxu0 0.0
        %973 = vmatpush1.msra.mxu0 0.0
        %974 = vmatprep.subr.mxu0 0.0
        %975 = vmatpush1.msra.mxu0 0.0
        %976 = vmatprep.subr.mxu0 0.0
        %977 = vmatpush1.msra.mxu0 0.0
        %978 = vmatprep.subr.mxu0 0.0
        %979 = vmatpush1.msra.mxu0 0.0
        %980 = vmatprep.subr.mxu0 0.0
        %981 = vmatpush1.msra.mxu0 0.0
        %982 = vmatprep.subr.mxu0 0.0
        %983 = vmatpush1.msra.mxu0 0.0
        %984 = vmatprep.subr.mxu0 0.0
        %985 = vmatpush1.msra.mxu0 0.0
        %986 = vmatprep.subr.mxu0 0.0
        %987 = vmatpush1.msra.mxu0 0.0
        %988 = vmatprep.subr.mxu0 0.0
        %989 = vmatpush1.msra.mxu0 0.0
        %990 = vmatprep.subr.mxu0 0.0
        %991 = vmatpush1.msra.mxu0 0.0
        %992 = vmatprep.mubr.f32.mxu0 0.0
        %v993 = vand.u32 %v300, 4294901760
        %v994 = vsub.f32 %v300, %v993
        %v995 = vand.u32 %v994, 4294901760
        %996 = vmatmul.mubr.f32.gmra.mrb[0].mxu0 %v995
        %v997 = vpop.f32.mrb[0].mxu0
        %v998 = vadd.f32 %v818, %v997
        %v999 = vpop.f32.mrb[0].mxu0
        %1000 = vmatprep.mubr.f32.mxu0 0.0
        %v1001 = vand.u32 %v303, 4294901760
        %v1002 = vsub.f32 %v303, %v1001
        %v1003 = vand.u32 %v1002, 4294901760
        %1004 = vmatmul.mubr.f32.gmra.mrb[0].mxu0 %v1003
        %v1005 = vpop.f32.mrb[0].mxu0
        %v1006 = vadd.f32 %v825, %v1005
        %v1007 = vpop.f32.mrb[0].mxu0
        %1008 = vmatprep.mubr.f32.mxu0 0.0
        %v1009 = vand.u32 %v306, 4294901760
        %v1010 = vsub.f32 %v306, %v1009
        %v1011 = vand.u32 %v1010, 4294901760
        %1012 = vmatmul.mubr.f32.gmra.mrb[0].mxu0 %v1011
        %v1013 = vpop.f32.mrb[0].mxu0
        %v1014 = vadd.f32 %v832, %v1013
        %v1015 = vpop.f32.mrb[0].mxu0
        %1016 = vmatprep.mubr.f32.mxu0 0.0
        %v1017 = vand.u32 %v309, 4294901760
        %v1018 = vsub.f32 %v309, %v1017
        %v1019 = vand.u32 %v1018, 4294901760
        %1020 = vmatmul.mubr.f32.gmra.mrb[0].mxu0 %v1019
        %v1021 = vpop.f32.mrb[0].mxu0
        %v1022 = vadd.f32 %v839, %v1021
        %v1023 = vpop.f32.mrb[0].mxu0
        %1024 = vmatprep.mubr.f32.mxu0 0.0
        %v1025 = vand.u32 %v312, 4294901760
        %v1026 = vsub.f32 %v312, %v1025
        %v1027 = vand.u32 %v1026, 4294901760
        %1028 = vmatmul.mubr.f32.gmra.mrb[0].mxu0 %v1027
        %v1029 = vpop.f32.mrb[0].mxu0
        %v1030 = vadd.f32 %v846, %v1029
        %v1031 = vpop.f32.mrb[0].mxu0
        %1032 = vmatprep.mubr.f32.mxu0 0.0
        %v1033 = vand.u32 %v315, 4294901760
        %v1034 = vsub.f32 %v315, %v1033
        %v1035 = vand.u32 %v1034, 4294901760
        %1036 = vmatmul.mubr.f32.gmra.mrb[0].mxu0 %v1035
        %v1037 = vpop.f32.mrb[0].mxu0
        %v1038 = vadd.f32 %v853, %v1037
        %v1039 = vpop.f32.mrb[0].mxu0
        %1040 = vmatprep.mubr.f32.mxu0 0.0
        %v1041 = vand.u32 %v318, 4294901760
        %v1042 = vsub.f32 %v318, %v1041
        %v1043 = vand.u32 %v1042, 4294901760
        %1044 = vmatmul.mubr.f32.gmra.mrb[0].mxu0 %v1043
        %v1045 = vpop.f32.mrb[0].mxu0
        %v1046 = vadd.f32 %v860, %v1045
        %v1047 = vpop.f32.mrb[0].mxu0
        %1048 = vmatprep.mubr.f32.mxu0 0.0
        %v1049 = vand.u32 %v321, 4294901760
        %v1050 = vsub.f32 %v321, %v1049
        %v1051 = vand.u32 %v1050, 4294901760
        %1052 = vmatmul.mubr.f32.gmra.mrb[0].mxu0 %v1051
        %v1053 = vpop.f32.mrb[0].mxu0
        %v1054 = vadd.f32 %v867, %v1053
        %v1055 = vpop.f32.mrb[0].mxu0
        %1056 = vmatprep.mubr.f32.mxu0 0.0
        %v1057 = vand.u32 %v324, 4294901760
        %v1058 = vsub.f32 %v324, %v1057
        %v1059 = vand.u32 %v1058, 4294901760
        %1060 = vmatmul.mubr.f32.gmra.mrb[0].mxu0 %v1059
        %v1061 = vpop.f32.mrb[0].mxu0
        %v1062 = vadd.f32 %v874, %v1061
        %v1063 = vpop.f32.mrb[0].mxu0
        %1064 = vmatprep.mubr.f32.mxu0 0.0
        %v1065 = vand.u32 %v327, 4294901760
        %v1066 = vsub.f32 %v327, %v1065
        %v1067 = vand.u32 %v1066, 4294901760
        %1068 = vmatmul.mubr.f32.gmra.mrb[0].mxu0 %v1067
        %v1069 = vpop.f32.mrb[0].mxu0
        %v1070 = vadd.f32 %v881, %v1069
        %v1071 = vpop.f32.mrb[0].mxu0
        %1072 = vmatprep.mubr.f32.mxu0 0.0
        %v1073 = vand.u32 %v330, 4294901760
        %v1074 = vsub.f32 %v330, %v1073
        %v1075 = vand.u32 %v1074, 4294901760
        %1076 = vmatmul.mubr.f32.gmra.mrb[0].mxu0 %v1075
        %v1077 = vpop.f32.mrb[0].mxu0
        %v1078 = vadd.f32 %v888, %v1077
        %v1079 = vpop.f32.mrb[0].mxu0
        %1080 = vmatprep.mubr.f32.mxu0 0.0
        %v1081 = vand.u32 %v333, 4294901760
        %v1082 = vsub.f32 %v333, %v1081
        %v1083 = vand.u32 %v1082, 4294901760
        %1084 = vmatmul.mubr.f32.gmra.mrb[0].mxu0 %v1083
        %v1085 = vpop.f32.mrb[0].mxu0
        %v1086 = vadd.f32 %v895, %v1085
        %v1087 = vpop.f32.mrb[0].mxu0
        %1088 = vmatprep.mubr.f32.mxu0 0.0
        %v1089 = vand.u32 %v336, 4294901760
        %v1090 = vsub.f32 %v336, %v1089
        %v1091 = vand.u32 %v1090, 4294901760
        %1092 = vmatmul.mubr.f32.gmra.mrb[0].mxu0 %v1091
        %v1093 = vpop.f32.mrb[0].mxu0
        %v1094 = vadd.f32 %v902, %v1093
        %v1095 = vpop.f32.mrb[0].mxu0
        %1096 = vmatprep.mubr.f32.mxu0 0.0
        %v1097 = vand.u32 %v339, 4294901760
        %v1098 = vsub.f32 %v339, %v1097
        %v1099 = vand.u32 %v1098, 4294901760
        %1100 = vmatmul.mubr.f32.gmra.mrb[0].mxu0 %v1099
        %v1101 = vpop.f32.mrb[0].mxu0
        %v1102 = vadd.f32 %v909, %v1101
        %v1103 = vpop.f32.mrb[0].mxu0
        %1104 = vmatprep.mubr.f32.mxu0 0.0
        %v1105 = vand.u32 %v342, 4294901760
        %v1106 = vsub.f32 %v342, %v1105
        %v1107 = vand.u32 %v1106, 4294901760
        %1108 = vmatmul.mubr.f32.gmra.mrb[0].mxu0 %v1107
        %v1109 = vpop.f32.mrb[0].mxu0
        %v1110 = vadd.f32 %v916, %v1109
        %v1111 = vpop.f32.mrb[0].mxu0
        %1112 = vmatprep.mubr.f32.mxu0 0.0
        %v1113 = vand.u32 %v345, 4294901760
        %v1114 = vsub.f32 %v345, %v1113
        %v1115 = vand.u32 %v1114, 4294901760
        %1116 = vmatmul.mubr.f32.gmra.mrb[0].mxu0 %v1115
        %v1117 = vpop.f32.mrb[0].mxu0
        %v1118 = vadd.f32 %v923, %v1117
        %v1119 = vpop.f32.mrb[0].mxu0
        %1120 = vdwg.mxu0
        %1121 = vmatprep.subr.mxu0 0.0
        %v1122 = vand.u32 %v296, 4294901760
        %v1123 = vsub.f32 %v296, %v1122
        %v1124 = vand.u32 %v1123, 4294901760
        %1125 = vmatpush1.msra.mxu0 %v1124
        %1126 = vmatprep.subr.mxu0 0.0
        %v1127 = vand.u32 %v297, 4294901760
        %v1128 = vsub.f32 %v297, %v1127
        %v1129 = vand.u32 %v1128, 4294901760
        %1130 = vmatpush1.msra.mxu0 %v1129
        %1131 = vmatprep.subr.mxu0 0.0
        %1132 = vmatpush1.msra.mxu0 0.0
        %1133 = vmatprep.subr.mxu0 0.0
        %1134 = vmatpush1.msra.mxu0 0.0
        %1135 = vmatprep.subr.mxu0 0.0
        %1136 = vmatpush1.msra.mxu0 0.0
        %1137 = vmatprep.subr.mxu0 0.0
        %1138 = vmatpush1.msra.mxu0 0.0
        %1139 = vmatprep.subr.mxu0 0.0
        %1140 = vmatpush1.msra.mxu0 0.0
        %1141 = vmatprep.subr.mxu0 0.0
        %1142 = vmatpush1.msra.mxu0 0.0
        %1143 = vmatprep.subr.mxu0 0.0
        %1144 = vmatpush1.msra.mxu0 0.0
        %1145 = vmatprep.subr.mxu0 0.0
        %1146 = vmatpush1.msra.mxu0 0.0
        %1147 = vmatprep.subr.mxu0 0.0
        %1148 = vmatpush1.msra.mxu0 0.0
        %1149 = vmatprep.subr.mxu0 0.0
        %1150 = vmatpush1.msra.mxu0 0.0
        %1151 = vmatprep.subr.mxu0 0.0
        %1152 = vmatpush1.msra.mxu0 0.0
        %1153 = vmatprep.subr.mxu0 0.0
        %1154 = vmatpush1.msra.mxu0 0.0
        %1155 = vmatprep.subr.mxu0 0.0
        %1156 = vmatpush1.msra.mxu0 0.0
        %1157 = vmatprep.subr.mxu0 0.0
        %1158 = vmatpush1.msra.mxu0 0.0
        %1159 = vmatprep.subr.mxu0 0.0
        %1160 = vmatpush1.msra.mxu0 0.0
        %1161 = vmatprep.subr.mxu0 0.0
        %1162 = vmatpush1.msra.mxu0 0.0
        %1163 = vmatprep.subr.mxu0 0.0
        %1164 = vmatpush1.msra.mxu0 0.0
        %1165 = vmatprep.subr.mxu0 0.0
        %1166 = vmatpush1.msra.mxu0 0.0
        %1167 = vmatprep.subr.mxu0 0.0
        %1168 = vmatpush1.msra.mxu0 0.0
        %1169 = vmatprep.subr.mxu0 0.0
        %1170 = vmatpush1.msra.mxu0 0.0
        %1171 = vmatprep.subr.mxu0 0.0
        %1172 = vmatpush1.msra.mxu0 0.0
        %1173 = vmatprep.subr.mxu0 0.0
        %1174 = vmatpush1.msra.mxu0 0.0
        %1175 = vmatprep.subr.mxu0 0.0
        %1176 = vmatpush1.msra.mxu0 0.0
        %1177 = vmatprep.subr.mxu0 0.0
        %1178 = vmatpush1.msra.mxu0 0.0
        %1179 = vmatprep.subr.mxu0 0.0
        %1180 = vmatpush1.msra.mxu0 0.0
        %1181 = vmatprep.subr.mxu0 0.0
        %1182 = vmatpush1.msra.mxu0 0.0
        %1183 = vmatprep.subr.mxu0 0.0
        %1184 = vmatpush1.msra.mxu0 0.0
        %1185 = vmatprep.subr.mxu0 0.0
        %1186 = vmatpush1.msra.mxu0 0.0
        %1187 = vmatprep.subr.mxu0 0.0
        %1188 = vmatpush1.msra.mxu0 0.0
        %1189 = vmatprep.subr.mxu0 0.0
        %1190 = vmatpush1.msra.mxu0 0.0
        %1191 = vmatprep.mubr.f32.mxu0 0.0
        %v1192 = vand.u32 %v300, 4294901760
        %1193 = vmatmul.mubr.f32.gmra.mrb[0].mxu0 %v1192
        %v1194 = vpop.f32.mrb[0].mxu0
        %v1195 = vadd.f32 %v998, %v1194
        %v1196 = vpop.f32.mrb[0].mxu0
        %1197 = vmatprep.mubr.f32.mxu0 0.0
        %v1198 = vand.u32 %v303, 4294901760
        %1199 = vmatmul.mubr.f32.gmra.mrb[0].mxu0 %v1198
        %v1200 = vpop.f32.mrb[0].mxu0
        %v1201 = vadd.f32 %v1006, %v1200
        %v1202 = vpop.f32.mrb[0].mxu0
        %1203 = vmatprep.mubr.f32.mxu0 0.0
        %v1204 = vand.u32 %v306, 4294901760
        %1205 = vmatmul.mubr.f32.gmra.mrb[0].mxu0 %v1204
        %v1206 = vpop.f32.mrb[0].mxu0
        %v1207 = vadd.f32 %v1014, %v1206
        %v1208 = vpop.f32.mrb[0].mxu0
        %1209 = vmatprep.mubr.f32.mxu0 0.0
        %v1210 = vand.u32 %v309, 4294901760
        %1211 = vmatmul.mubr.f32.gmra.mrb[0].mxu0 %v1210
        %v1212 = vpop.f32.mrb[0].mxu0
        %v1213 = vadd.f32 %v1022, %v1212
        %v1214 = vpop.f32.mrb[0].mxu0
        %1215 = vmatprep.mubr.f32.mxu0 0.0
        %v1216 = vand.u32 %v312, 4294901760
        %1217 = vmatmul.mubr.f32.gmra.mrb[0].mxu0 %v1216
        %v1218 = vpop.f32.mrb[0].mxu0
        %v1219 = vadd.f32 %v1030, %v1218
        %v1220 = vpop.f32.mrb[0].mxu0
        %1221 = vmatprep.mubr.f32.mxu0 0.0
        %v1222 = vand.u32 %v315, 4294901760
        %1223 = vmatmul.mubr.f32.gmra.mrb[0].mxu0 %v1222
        %v1224 = vpop.f32.mrb[0].mxu0
        %v1225 = vadd.f32 %v1038, %v1224
        %v1226 = vpop.f32.mrb[0].mxu0
        %1227 = vmatprep.mubr.f32.mxu0 0.0
        %v1228 = vand.u32 %v318, 4294901760
        %1229 = vmatmul.mubr.f32.gmra.mrb[0].mxu0 %v1228
        %v1230 = vpop.f32.mrb[0].mxu0
        %v1231 = vadd.f32 %v1046, %v1230
        %v1232 = vpop.f32.mrb[0].mxu0
        %1233 = vmatprep.mubr.f32.mxu0 0.0
        %v1234 = vand.u32 %v321, 4294901760
        %1235 = vmatmul.mubr.f32.gmra.mrb[0].mxu0 %v1234
        %v1236 = vpop.f32.mrb[0].mxu0
        %v1237 = vadd.f32 %v1054, %v1236
        %v1238 = vpop.f32.mrb[0].mxu0
        %1239 = vmatprep.mubr.f32.mxu0 0.0
        %v1240 = vand.u32 %v324, 4294901760
        %1241 = vmatmul.mubr.f32.gmra.mrb[0].mxu0 %v1240
        %v1242 = vpop.f32.mrb[0].mxu0
        %v1243 = vadd.f32 %v1062, %v1242
        %v1244 = vpop.f32.mrb[0].mxu0
        %1245 = vmatprep.mubr.f32.mxu0 0.0
        %v1246 = vand.u32 %v327, 4294901760
        %1247 = vmatmul.mubr.f32.gmra.mrb[0].mxu0 %v1246
        %v1248 = vpop.f32.mrb[0].mxu0
        %v1249 = vadd.f32 %v1070, %v1248
        %v1250 = vpop.f32.mrb[0].mxu0
        %1251 = vmatprep.mubr.f32.mxu0 0.0
        %v1252 = vand.u32 %v330, 4294901760
        %1253 = vmatmul.mubr.f32.gmra.mrb[0].mxu0 %v1252
        %v1254 = vpop.f32.mrb[0].mxu0
        %v1255 = vadd.f32 %v1078, %v1254
        %v1256 = vpop.f32.mrb[0].mxu0
        %1257 = vmatprep.mubr.f32.mxu0 0.0
        %v1258 = vand.u32 %v333, 4294901760
        %1259 = vmatmul.mubr.f32.gmra.mrb[0].mxu0 %v1258
        %v1260 = vpop.f32.mrb[0].mxu0
        %v1261 = vadd.f32 %v1086, %v1260
        %v1262 = vpop.f32.mrb[0].mxu0
        %1263 = vmatprep.mubr.f32.mxu0 0.0
        %v1264 = vand.u32 %v336, 4294901760
        %1265 = vmatmul.mubr.f32.gmra.mrb[0].mxu0 %v1264
        %v1266 = vpop.f32.mrb[0].mxu0
        %v1267 = vadd.f32 %v1094, %v1266
        %v1268 = vpop.f32.mrb[0].mxu0
        %1269 = vmatprep.mubr.f32.mxu0 0.0
        %v1270 = vand.u32 %v339, 4294901760
        %1271 = vmatmul.mubr.f32.gmra.mrb[0].mxu0 %v1270
        %v1272 = vpop.f32.mrb[0].mxu0
        %v1273 = vadd.f32 %v1102, %v1272
        %v1274 = vpop.f32.mrb[0].mxu0
        %1275 = vmatprep.mubr.f32.mxu0 0.0
        %v1276 = vand.u32 %v342, 4294901760
        %1277 = vmatmul.mubr.f32.gmra.mrb[0].mxu0 %v1276
        %v1278 = vpop.f32.mrb[0].mxu0
        %v1279 = vadd.f32 %v1110, %v1278
        %v1280 = vpop.f32.mrb[0].mxu0
        %1281 = vmatprep.mubr.f32.mxu0 0.0
        %v1282 = vand.u32 %v345, 4294901760
        %1283 = vmatmul.mubr.f32.gmra.mrb[0].mxu0 %v1282
        %v1284 = vpop.f32.mrb[0].mxu0
        %v1285 = vadd.f32 %v1118, %v1284
        %v1286 = vpop.f32.mrb[0].mxu0
        %1287 = vdwg.mxu0
        %1288 = vmatprep.subr.mxu0 0.0
        %v1289 = vand.u32 %v296, 4294901760
        %1290 = vmatpush1.msra.mxu0 %v1289
        %1291 = vmatprep.subr.mxu0 0.0
        %v1292 = vand.u32 %v297, 4294901760
        %1293 = vmatpush1.msra.mxu0 %v1292
        %1294 = vmatprep.subr.mxu0 0.0
        %1295 = vmatpush1.msra.mxu0 0.0
        %1296 = vmatprep.subr.mxu0 0.0
        %1297 = vmatpush1.msra.mxu0 0.0
        %1298 = vmatprep.subr.mxu0 0.0
        %1299 = vmatpush1.msra.mxu0 0.0
        %1300 = vmatprep.subr.mxu0 0.0
        %1301 = vmatpush1.msra.mxu0 0.0
        %1302 = vmatprep.subr.mxu0 0.0
        %1303 = vmatpush1.msra.mxu0 0.0
        %1304 = vmatprep.subr.mxu0 0.0
        %1305 = vmatpush1.msra.mxu0 0.0
        %1306 = vmatprep.subr.mxu0 0.0
        %1307 = vmatpush1.msra.mxu0 0.0
        %1308 = vmatprep.subr.mxu0 0.0
        %1309 = vmatpush1.msra.mxu0 0.0
        %1310 = vmatprep.subr.mxu0 0.0
        %1311 = vmatpush1.msra.mxu0 0.0
        %1312 = vmatprep.subr.mxu0 0.0
        %1313 = vmatpush1.msra.mxu0 0.0
        %1314 = vmatprep.subr.mxu0 0.0
        %1315 = vmatpush1.msra.mxu0 0.0
        %1316 = vmatprep.subr.mxu0 0.0
        %1317 = vmatpush1.msra.mxu0 0.0
        %1318 = vmatprep.subr.mxu0 0.0
        %1319 = vmatpush1.msra.mxu0 0.0
        %1320 = vmatprep.subr.mxu0 0.0
        %1321 = vmatpush1.msra.mxu0 0.0
        %1322 = vmatprep.subr.mxu0 0.0
        %1323 = vmatpush1.msra.mxu0 0.0
        %1324 = vmatprep.subr.mxu0 0.0
        %1325 = vmatpush1.msra.mxu0 0.0
        %1326 = vmatprep.subr.mxu0 0.0
        %1327 = vmatpush1.msra.mxu0 0.0
        %1328 = vmatprep.subr.mxu0 0.0
        %1329 = vmatpush1.msra.mxu0 0.0
        %1330 = vmatprep.subr.mxu0 0.0
        %1331 = vmatpush1.msra.mxu0 0.0
        %1332 = vmatprep.subr.mxu0 0.0
        %1333 = vmatpush1.msra.mxu0 0.0
        %1334 = vmatprep.subr.mxu0 0.0
        %1335 = vmatpush1.msra.mxu0 0.0
        %1336 = vmatprep.subr.mxu0 0.0
        %1337 = vmatpush1.msra.mxu0 0.0
        %1338 = vmatprep.subr.mxu0 0.0
        %1339 = vmatpush1.msra.mxu0 0.0
        %1340 = vmatprep.subr.mxu0 0.0
        %1341 = vmatpush1.msra.mxu0 0.0
        %1342 = vmatprep.subr.mxu0 0.0
        %1343 = vmatpush1.msra.mxu0 0.0
        %1344 = vmatprep.subr.mxu0 0.0
        %1345 = vmatpush1.msra.mxu0 0.0
        %1346 = vmatprep.subr.mxu0 0.0
        %1347 = vmatpush1.msra.mxu0 0.0
        %1348 = vmatprep.subr.mxu0 0.0
        %1349 = vmatpush1.msra.mxu0 0.0
        %1350 = vmatprep.subr.mxu0 0.0
        %1351 = vmatpush1.msra.mxu0 0.0
        %1352 = vmatprep.subr.mxu0 0.0
        %1353 = vmatpush1.msra.mxu0 0.0
        %1354 = vmatprep.mubr.f32.mxu0 0.0
        %v1355 = vand.u32 %v300, 4294901760
        %1356 = vmatmul.mubr.f32.gmra.mrb[0].mxu0 %v1355
        %v1357 = vpop.f32.mrb[0].mxu0
        %v1358 = vadd.f32 %v1195, %v1357
        %v1359 = vpop.f32.mrb[0].mxu0
        %1360 = vmatprep.mubr.f32.mxu0 0.0
        %v1361 = vand.u32 %v303, 4294901760
        %1362 = vmatmul.mubr.f32.gmra.mrb[0].mxu0 %v1361
        %v1363 = vpop.f32.mrb[0].mxu0
        %v1364 = vadd.f32 %v1201, %v1363
        %v1365 = vpop.f32.mrb[0].mxu0
        %1366 = vmatprep.mubr.f32.mxu0 0.0
        %v1367 = vand.u32 %v306, 4294901760
        %1368 = vmatmul.mubr.f32.gmra.mrb[0].mxu0 %v1367
        %v1369 = vpop.f32.mrb[0].mxu0
        %v1370 = vadd.f32 %v1207, %v1369
        %v1371 = vpop.f32.mrb[0].mxu0
        %1372 = vmatprep.mubr.f32.mxu0 0.0
        %v1373 = vand.u32 %v309, 4294901760
        %1374 = vmatmul.mubr.f32.gmra.mrb[0].mxu0 %v1373
        %v1375 = vpop.f32.mrb[0].mxu0
        %v1376 = vadd.f32 %v1213, %v1375
        %v1377 = vpop.f32.mrb[0].mxu0
        %1378 = vmatprep.mubr.f32.mxu0 0.0
        %v1379 = vand.u32 %v312, 4294901760
        %1380 = vmatmul.mubr.f32.gmra.mrb[0].mxu0 %v1379
        %v1381 = vpop.f32.mrb[0].mxu0
        %v1382 = vadd.f32 %v1219, %v1381
        %v1383 = vpop.f32.mrb[0].mxu0
        %1384 = vmatprep.mubr.f32.mxu0 0.0
        %v1385 = vand.u32 %v315, 4294901760
        %1386 = vmatmul.mubr.f32.gmra.mrb[0].mxu0 %v1385
        %v1387 = vpop.f32.mrb[0].mxu0
        %v1388 = vadd.f32 %v1225, %v1387
        %v1389 = vpop.f32.mrb[0].mxu0
        %1390 = vmatprep.mubr.f32.mxu0 0.0
        %v1391 = vand.u32 %v318, 4294901760
        %1392 = vmatmul.mubr.f32.gmra.mrb[0].mxu0 %v1391
        %v1393 = vpop.f32.mrb[0].mxu0
        %v1394 = vadd.f32 %v1231, %v1393
        %v1395 = vpop.f32.mrb[0].mxu0
        %1396 = vmatprep.mubr.f32.mxu0 0.0
        %v1397 = vand.u32 %v321, 4294901760
        %1398 = vmatmul.mubr.f32.gmra.mrb[0].mxu0 %v1397
        %v1399 = vpop.f32.mrb[0].mxu0
        %v1400 = vadd.f32 %v1237, %v1399
        %v1401 = vpop.f32.mrb[0].mxu0
        %1402 = vmatprep.mubr.f32.mxu0 0.0
        %v1403 = vand.u32 %v324, 4294901760
        %1404 = vmatmul.mubr.f32.gmra.mrb[0].mxu0 %v1403
        %v1405 = vpop.f32.mrb[0].mxu0
        %v1406 = vadd.f32 %v1243, %v1405
        %v1407 = vpop.f32.mrb[0].mxu0
        %1408 = vmatprep.mubr.f32.mxu0 0.0
        %v1409 = vand.u32 %v327, 4294901760
        %1410 = vmatmul.mubr.f32.gmra.mrb[0].mxu0 %v1409
        %v1411 = vpop.f32.mrb[0].mxu0
        %v1412 = vadd.f32 %v1249, %v1411
        %v1413 = vpop.f32.mrb[0].mxu0
        %1414 = vmatprep.mubr.f32.mxu0 0.0
        %v1415 = vand.u32 %v330, 4294901760
        %1416 = vmatmul.mubr.f32.gmra.mrb[0].mxu0 %v1415
        %v1417 = vpop.f32.mrb[0].mxu0
        %v1418 = vadd.f32 %v1255, %v1417
        %v1419 = vpop.f32.mrb[0].mxu0
        %1420 = vmatprep.mubr.f32.mxu0 0.0
        %v1421 = vand.u32 %v333, 4294901760
        %1422 = vmatmul.mubr.f32.gmra.mrb[0].mxu0 %v1421
        %v1423 = vpop.f32.mrb[0].mxu0
        %v1424 = vadd.f32 %v1261, %v1423
        %v1425 = vpop.f32.mrb[0].mxu0
        %1426 = vmatprep.mubr.f32.mxu0 0.0
        %v1427 = vand.u32 %v336, 4294901760
        %1428 = vmatmul.mubr.f32.gmra.mrb[0].mxu0 %v1427
        %v1429 = vpop.f32.mrb[0].mxu0
        %v1430 = vadd.f32 %v1267, %v1429
        %v1431 = vpop.f32.mrb[0].mxu0
        %1432 = vmatprep.mubr.f32.mxu0 0.0
        %v1433 = vand.u32 %v339, 4294901760
        %1434 = vmatmul.mubr.f32.gmra.mrb[0].mxu0 %v1433
        %v1435 = vpop.f32.mrb[0].mxu0
        %v1436 = vadd.f32 %v1273, %v1435
        %v1437 = vpop.f32.mrb[0].mxu0
        %1438 = vmatprep.mubr.f32.mxu0 0.0
        %v1439 = vand.u32 %v342, 4294901760
        %1440 = vmatmul.mubr.f32.gmra.mrb[0].mxu0 %v1439
        %v1441 = vpop.f32.mrb[0].mxu0
        %v1442 = vadd.f32 %v1279, %v1441
        %v1443 = vpop.f32.mrb[0].mxu0
        %1444 = vmatprep.mubr.f32.mxu0 0.0
        %v1445 = vand.u32 %v345, 4294901760
        %1446 = vmatmul.mubr.f32.gmra.mrb[0].mxu0 %v1445
        %v1447 = vpop.f32.mrb[0].mxu0
        %v1448 = vadd.f32 %v1285, %v1447
        %v1449 = vpop.f32.mrb[0].mxu0
        %1450 = vdwg.mxu0
        %1451 = vst [vmem:[%s246] sm:$0xff] %v1358
        %1452 = vst [vmem:[%s246 + $0x8] sm:$0xff] %v1364
        %1453 = vst [vmem:[%s246 + $0x10] sm:$0xff] %v1370
        %1454 = vst [vmem:[%s246 + $0x18] sm:$0xff] %v1376
        %1455 = vst [vmem:[%s246 + $0x20] sm:$0xff] %v1382
        %1456 = vst [vmem:[%s246 + $0x28] sm:$0xff] %v1388
        %1457 = vst [vmem:[%s246 + $0x30] sm:$0xff] %v1394
        %1458 = vst [vmem:[%s246 + $0x38] sm:$0xff] %v1400
        %1459 = vst [vmem:[%s246 + $0x40] sm:$0xff] %v1406
        %1460 = vst [vmem:[%s246 + $0x48] sm:$0xff] %v1412
        %1461 = vst [vmem:[%s246 + $0x50] sm:$0xff] %v1418
        %1462 = vst [vmem:[%s246 + $0x58] sm:$0xff] %v1424
        %1463 = vst [vmem:[%s246 + $0x60] sm:$0xff] %v1430
        %1464 = vst [vmem:[%s246 + $0x68] sm:$0xff] %v1436
        %1465 = vst [vmem:[%s246 + $0x70] sm:$0xff] %v1442
        %1466 = vst [vmem:[%s246 + $0x78] sm:$0xff] %v1448
        %v1467 = vld [vmem:[%s2] sm:$0x1]
        %v1469 = vlaneseq
        %v1470 = vshrl.u32 %v1469, 7
        %v1471 = vsub.s32 0, %v1470
        %v1472 = vrot.slane %v1467, %v1471
        %v1474 = vmul.f32 %v1358, %v1472
        %v1475 = vmul.f32 %v1364, %v1472
        %v1476 = vmul.f32 %v1370, %v1472
        %v1477 = vmul.f32 %v1376, %v1472
        %v1478 = vmul.f32 %v1382, %v1472
        %v1479 = vmul.f32 %v1388, %v1472
        %v1480 = vmul.f32 %v1394, %v1472
        %v1481 = vmul.f32 %v1400, %v1472
        %v1482 = vmul.f32 %v1406, %v1472
        %v1483 = vmul.f32 %v1412, %v1472
        %v1484 = vmul.f32 %v1418, %v1472
        %v1485 = vmul.f32 %v1424, %v1472
        %v1486 = vmul.f32 %v1430, %v1472
        %v1487 = vmul.f32 %v1436, %v1472
        %v1488 = vmul.f32 %v1442, %v1472
        %v1489 = vmul.f32 %v1448, %v1472
        %1490 = vadd.xlane.f32.xlu0 %v1474
        %v1491 = vpop.xlane.xlu0 %1490
        %1492 = vadd.xlane.f32.xlu0 %v1475
        %v1493 = vpop.xlane.xlu0 %1492
        %1494 = vadd.xlane.f32.xlu0 %v1476
        %v1495 = vpop.xlane.xlu0 %1494
        %1496 = vadd.xlane.f32.xlu0 %v1477
        %v1497 = vpop.xlane.xlu0 %1496
        %1498 = vadd.xlane.f32.xlu0 %v1478
        %v1499 = vpop.xlane.xlu0 %1498
        %1500 = vadd.xlane.f32.xlu0 %v1479
        %v1501 = vpop.xlane.xlu0 %1500
        %1502 = vadd.xlane.f32.xlu0 %v1480
        %v1503 = vpop.xlane.xlu0 %1502
        %1504 = vadd.xlane.f32.xlu0 %v1481
        %v1505 = vpop.xlane.xlu0 %1504
        %1506 = vadd.xlane.f32.xlu0 %v1482
        %v1507 = vpop.xlane.xlu0 %1506
        %1508 = vadd.xlane.f32.xlu0 %v1483
        %v1509 = vpop.xlane.xlu0 %1508
        %1510 = vadd.xlane.f32.xlu0 %v1484
        %v1511 = vpop.xlane.xlu0 %1510
        %1512 = vadd.xlane.f32.xlu0 %v1485
        %v1513 = vpop.xlane.xlu0 %1512
        %1514 = vadd.xlane.f32.xlu0 %v1486
        %v1515 = vpop.xlane.xlu0 %1514
        %1516 = vadd.xlane.f32.xlu0 %v1487
        %v1517 = vpop.xlane.xlu0 %1516
        %1518 = vadd.xlane.f32.xlu0 %v1488
        %v1519 = vpop.xlane.xlu0 %1518
        %1520 = vadd.xlane.f32.xlu0 %v1489
        %v1521 = vpop.xlane.xlu0 %1520
        %vm1522 = vcmask 7168
        %1523 = vst.msk [vmem:[%s272] sm:$0xff] %vm1522, %v1491
        %1524 = vst.msk [vmem:[%s272 + $0x8] sm:$0xff] %vm1522, %v1493
        %1525 = vst.msk [vmem:[%s272 + $0x10] sm:$0xff] %vm1522, %v1495
        %1526 = vst.msk [vmem:[%s272 + $0x18] sm:$0xff] %vm1522, %v1497
        %1527 = vst.msk [vmem:[%s272 + $0x20] sm:$0xff] %vm1522, %v1499
        %1528 = vst.msk [vmem:[%s272 + $0x28] sm:$0xff] %vm1522, %v1501
        %1529 = vst.msk [vmem:[%s272 + $0x30] sm:$0xff] %vm1522, %v1503
        %1530 = vst.msk [vmem:[%s272 + $0x38] sm:$0xff] %vm1522, %v1505
        %1531 = vst.msk [vmem:[%s272 + $0x40] sm:$0xff] %vm1522, %v1507
        %1532 = vst.msk [vmem:[%s272 + $0x48] sm:$0xff] %vm1522, %v1509
        %1533 = vst.msk [vmem:[%s272 + $0x50] sm:$0xff] %vm1522, %v1511
        %1534 = vst.msk [vmem:[%s272 + $0x58] sm:$0xff] %vm1522, %v1513
        %1535 = vst.msk [vmem:[%s272 + $0x60] sm:$0xff] %vm1522, %v1515
        %1536 = vst.msk [vmem:[%s272 + $0x68] sm:$0xff] %vm1522, %v1517
        %1537 = vst.msk [vmem:[%s272 + $0x70] sm:$0xff] %vm1522, %v1519
        %1538 = vst.msk [vmem:[%s272 + $0x78] sm:$0xff] %vm1522, %v1521
        %v1539 = vld [vmem:[%s3] sm:$0x1]
        %v1541 = vlaneseq
        %v1542 = vshrl.u32 %v1541, 7
        %v1543 = vsub.s32 0, %v1542
        %v1544 = vrot.slane %v1539, %v1543
        %v1546 = vmul.f32 %v1358, %v1544
        %v1547 = vmul.f32 %v1364, %v1544
        %v1548 = vmul.f32 %v1370, %v1544
        %v1549 = vmul.f32 %v1376, %v1544
        %v1550 = vmul.f32 %v1382, %v1544
        %v1551 = vmul.f32 %v1388, %v1544
        %v1552 = vmul.f32 %v1394, %v1544
        %v1553 = vmul.f32 %v1400, %v1544
        %v1554 = vmul.f32 %v1406, %v1544
        %v1555 = vmul.f32 %v1412, %v1544
        %v1556 = vmul.f32 %v1418, %v1544
        %v1557 = vmul.f32 %v1424, %v1544
        %v1558 = vmul.f32 %v1430, %v1544
        %v1559 = vmul.f32 %v1436, %v1544
        %v1560 = vmul.f32 %v1442, %v1544
        %v1561 = vmul.f32 %v1448, %v1544
        %1562 = vadd.xlane.f32.xlu0 %v1546
        %v1563 = vpop.xlane.xlu0 %1562
        %1564 = vadd.xlane.f32.xlu0 %v1547
        %v1565 = vpop.xlane.xlu0 %1564
        %1566 = vadd.xlane.f32.xlu0 %v1548
        %v1567 = vpop.xlane.xlu0 %1566
        %1568 = vadd.xlane.f32.xlu0 %v1549
        %v1569 = vpop.xlane.xlu0 %1568
        %1570 = vadd.xlane.f32.xlu0 %v1550
        %v1571 = vpop.xlane.xlu0 %1570
        %1572 = vadd.xlane.f32.xlu0 %v1551
        %v1573 = vpop.xlane.xlu0 %1572
        %1574 = vadd.xlane.f32.xlu0 %v1552
        %v1575 = vpop.xlane.xlu0 %1574
        %1576 = vadd.xlane.f32.xlu0 %v1553
        %v1577 = vpop.xlane.xlu0 %1576
        %1578 = vadd.xlane.f32.xlu0 %v1554
        %v1579 = vpop.xlane.xlu0 %1578
        %1580 = vadd.xlane.f32.xlu0 %v1555
        %v1581 = vpop.xlane.xlu0 %1580
        %1582 = vadd.xlane.f32.xlu0 %v1556
        %v1583 = vpop.xlane.xlu0 %1582
        %1584 = vadd.xlane.f32.xlu0 %v1557
        %v1585 = vpop.xlane.xlu0 %1584
        %1586 = vadd.xlane.f32.xlu0 %v1558
        %v1587 = vpop.xlane.xlu0 %1586
        %1588 = vadd.xlane.f32.xlu0 %v1559
        %v1589 = vpop.xlane.xlu0 %1588
        %1590 = vadd.xlane.f32.xlu0 %v1560
        %v1591 = vpop.xlane.xlu0 %1590
        %1592 = vadd.xlane.f32.xlu0 %v1561
        %v1593 = vpop.xlane.xlu0 %1592
        %1594 = vst.msk [vmem:[%s278] sm:$0xff] %vm1522, %v1563
        %1595 = vst.msk [vmem:[%s278 + $0x8] sm:$0xff] %vm1522, %v1565
        %1596 = vst.msk [vmem:[%s278 + $0x10] sm:$0xff] %vm1522, %v1567
        %1597 = vst.msk [vmem:[%s278 + $0x18] sm:$0xff] %vm1522, %v1569
        %1598 = vst.msk [vmem:[%s278 + $0x20] sm:$0xff] %vm1522, %v1571
        %1599 = vst.msk [vmem:[%s278 + $0x28] sm:$0xff] %vm1522, %v1573
        %1600 = vst.msk [vmem:[%s278 + $0x30] sm:$0xff] %vm1522, %v1575
        %1601 = vst.msk [vmem:[%s278 + $0x38] sm:$0xff] %vm1522, %v1577
        %1602 = vst.msk [vmem:[%s278 + $0x40] sm:$0xff] %vm1522, %v1579
        %1603 = vst.msk [vmem:[%s278 + $0x48] sm:$0xff] %vm1522, %v1581
        %1604 = vst.msk [vmem:[%s278 + $0x50] sm:$0xff] %vm1522, %v1583
        %1605 = vst.msk [vmem:[%s278 + $0x58] sm:$0xff] %vm1522, %v1585
        %1606 = vst.msk [vmem:[%s278 + $0x60] sm:$0xff] %vm1522, %v1587
        %1607 = vst.msk [vmem:[%s278 + $0x68] sm:$0xff] %vm1522, %v1589
        %1608 = vst.msk [vmem:[%s278 + $0x70] sm:$0xff] %vm1522, %v1591
        %1609 = vst.msk [vmem:[%s278 + $0x78] sm:$0xff] %vm1522, %v1593
        %s1610 = sand.u32 %s118, 1
        %s1611 = scalar_lea.sflag [#allocation3], %s1610
        %s1612 = sand.u32 %s118, 1
        %s1613 = smul.addr %s1612, 128
        %s1614 = scalar_lea.vmem [#allocation2], %s1613
        %s1615 = smul.u32 16, %s21
        %p1616 = scmp.lt.s32.totalorder %s1615, 31
        %s1617 = scalar_select %p1616, %s1615, 31
        %s1618 = smul.addr %s1617, 8
        %s1619 = scalar_lea.vmem %s5, %s1618
        %s1620 = smul.u32 16, %s21
        %p1621 = scmp.lt.s32.totalorder %s1620, 31
        %s1622 = scalar_select %p1621, %s1620, 31
        %s1623 = smul.addr %s1622, 8
        %s1624 = scalar_lea.vmem %s6, %s1623
        // Predicated region
        $region37: #{tpu_custom_call.1} parent=35 // pred_check
          %p1625 = pneg %p128
        $region38: #{tpu_custom_call.1} parent=35 // pred_check_branch
          %1627 = sbr.rel (%p1625) target = $region40
        $region39: #{tpu_custom_call.1} parent=35 // pred_region
          %s1628 = smul.u32 16, %s21
          %s1630 = ssub.s32 2048, 2048
          %1631 = vsyncadd %s1611, %s1630
          %s1632 = smul.addr %s1628, 128
          %s1633 = scalar_lea.hbm %s4, %s1632
          %s1634 = sshll.u32 %s1614, 4
          %s1635 = int_to_ptr.vmem [resolvable:$true] %s1634
          %1640 = dma.vmem_to_hbm [thread:$0]  %s1635, 2048, %s1633, %s1611, 128, 128, 8
        $region40: #{tpu_custom_call.1} parent=35 // pred_fallthru
          _
        // Predicated region
        $region41: #{tpu_custom_call.1} parent=35 // pred_check
          %p1641 = pneg %p154
        $region42: #{tpu_custom_call.1} parent=35 // pred_check_branch
          %1643 = sbr.rel (%p1641) target = $region44
        $region43: #{tpu_custom_call.1} parent=35 // pred_region
          %s1644 = smul.u32 16, %s21
        $region44: #{tpu_custom_call.1} parent=35 // pred_fallthru
          _
        // Predicated region
        $region45: #{tpu_custom_call.1} parent=35 // pred_check
          %p1645 = pneg %p180
        $region46: #{tpu_custom_call.1} parent=35 // pred_check_branch
          %1647 = sbr.rel (%p1645) target = $region48
        $region47: #{tpu_custom_call.1} parent=35 // pred_region
          %s1648 = smul.u32 16, %s21
        $region48: #{tpu_custom_call.1} parent=35 // pred_fallthru
          _
      $region36: #{tpu_custom_call.1} parent=5 // pred_fallthru
        _
      %p1649 = scmp.le.s32.totalorder 2, %s16
      // Predicated region
      $region49: #{tpu_custom_call.1} parent=5 // pred_check
        %p1650 = pneg %p1649
      $region50: #{tpu_custom_call.1} parent=5 // pred_check_branch
        %1652 = sbr.rel (%p1650) target = $region52
      $region51: #{tpu_custom_call.1} parent=5 // pred_region
        %s1653 = ssub.s32 %s16, 2
        // Predicated region
        $region53: #{tpu_custom_call.1} parent=51 // pred_check
          %p1654 = pneg %p134
        $region54: #{tpu_custom_call.1} parent=51 // pred_check_branch
          %1656 = sbr.rel (%p1654) target = $region56
        $region55: #{tpu_custom_call.1} parent=51 // pred_region
          %s1657 = sand.u32 %s119, 1
          %s1658 = scalar_lea.sflag [#allocation3], %s1657
          %s1659 = sand.u32 %s119, 1
          %s1660 = smul.addr %s1659, 128
          %s1661 = scalar_lea.vmem [#allocation2], %s1660
          %1662 = dma.done %s1658, 2048
        $region56: #{tpu_custom_call.1} parent=51 // pred_fallthru
          _
        // Predicated region
        $region57: #{tpu_custom_call.1} parent=51 // pred_check
          %p1663 = pneg %p160
        $region58: #{tpu_custom_call.1} parent=51 // pred_check_branch
          %1665 = sbr.rel (%p1663) target = $region60
        $region59: #{tpu_custom_call.1} parent=51 // pred_region
          %s1666 = smul.u32 16, %s22
          %p1667 = scmp.lt.s32.totalorder %s1666, 31
          %s1668 = scalar_select %p1667, %s1666, 31
          %s1669 = smul.addr %s1668, 8
          %s1670 = scalar_lea.vmem %s5, %s1669
        $region60: #{tpu_custom_call.1} parent=51 // pred_fallthru
          _
        // Predicated region
        $region61: #{tpu_custom_call.1} parent=51 // pred_check
          %p1671 = pneg %p186
        $region62: #{tpu_custom_call.1} parent=51 // pred_check_branch
          %1673 = sbr.rel (%p1671) target = $region64
        $region63: #{tpu_custom_call.1} parent=51 // pred_region
          %s1674 = smul.u32 16, %s22
          %p1675 = scmp.lt.s32.totalorder %s1674, 31
          %s1676 = scalar_select %p1675, %s1674, 31
          %s1677 = smul.addr %s1676, 8
          %s1678 = scalar_lea.vmem %s6, %s1677
        $region64: #{tpu_custom_call.1} parent=51 // pred_fallthru
          _
      $region52: #{tpu_custom_call.1} parent=5 // pred_fallthru
        _
    $region6: #{tpu_custom_call.1} parent=1 // loop_footer
      %s20 = sadd.s32 1, %s16
    $region7: #{tpu_custom_call.1} parent=1 // loop_footer_branch
      %15 = sbr.rel target = $region3
    $region8: #{tpu_custom_call.1} parent=1 // loop_exit
      _
    %1679 = vsyncpa [#allocation3], 1
    %s1680 = scalar_lea.sflag [#allocation3], 1
    %1681 = vsyncpa %s1680, 1

</llo_original>
